<compile_context>
chip_gen: v5e
topology: v5e:2x2
jax: 0.10.0
libtpu: 0.0.40
codegen_flags: <defaults>
</compile_context>

<pallas_src>
import functools

import numpy as np
import jax
import jax.numpy as jnp
from jax.experimental import pallas as pl
from jax.experimental.pallas import tpu as pltpu


# ------------------------- in-kernel building blocks -------------------------

def _gelu(x):
    # TODO(synk): PyTorch nn.GELU() defaults to the exact erf formulation; the
    # tanh approximation (max abs diff ~3e-4) is used to stay on
    # guaranteed-supported Mosaic elementwise primitives.
    return jax.nn.gelu(x, approximate=True)


def _build_taps(x, masks, *, W):
    """Stack the 9 shifted+masked 3x3 taps of a lane-dense activation.

    x     : (C, HW) f32, spatial flattened on lanes (row-major p = h*W + w).
    masks : (9, HW) f32 precomputed boundary masks (1.0 = source pixel valid).
    Returns (9*C, HW) bf16 — a single K=9*C MXU contraction operand.
    """
    hw = x.shape[1]
    taps = []
    for tap in range(9):
        oy, ox = tap // 3 - 1, tap % 3 - 1
        if oy == 0 and ox == 0:
            taps.append(x)                                   # center tap, no mask
        else:
            s = oy * W + ox
            shifted = pltpu.roll(x, shift=(-s) % hw, axis=1)  # XLU lane rotate
            taps.append(shifted * masks[tap:tap + 1, :])      # boundary mask (VPU)
    # Concatenate in f32 (8-row aligned), single bf16 cast of the stacked operand.
    return jnp.concatenate(taps, axis=0).astype(jnp.bfloat16)


def _conv3x3_gn(x, masks, w_ref, gamma, beta, *, W, eps):
    """3x3 'same' conv (bias-free) + GroupNorm(1, C_out), fully in vregs.

    w_ref : (C_out, 9*C_in) bf16 ref; column block t holds the PyTorch weight
            slab w[:, :, t//3, t%3]  (== torch_w.permute(0,2,3,1).reshape(C_out,-1)).
    gamma, beta : (C_out, 1) f32 GroupNorm affine parameters.
    """
    taps = _build_taps(x, masks, W=W)                            # (9*C_in, HW) bf16
    acc = jnp.dot(w_ref[...], taps, preferred_element_type=jnp.float32)
    # GroupNorm(num_groups=1): normalize over all (C_out, HW) elements per
    # sample (biased variance, eps=1e-5), then per-channel affine.
    mu = jnp.mean(jnp.mean(acc, axis=1, keepdims=True), axis=0, keepdims=True)
    diff = acc - mu
    var = jnp.mean(jnp.mean(diff * diff, axis=1, keepdims=True), axis=0,
                   keepdims=True)
    return diff * jax.lax.rsqrt(var + eps) * gamma + beta


# ------------------------------ fused Pallas kernel ---------------------------

def _up_block_kernel(x_ref, skip_ref, t_ref, up_ref, mask_ref,
                     w1_ref, g1_ref, b1_ref,
                     w2_ref, g2_ref, b2_ref,
                     w3_ref, g3_ref, b3_ref,
                     w4_ref, g4_ref, b4_ref,
                     we_ref, be_ref,
                     o_ref, *, W, eps):
    masks = mask_ref[...]                                        # (9, HW) f32

    # 1) Bilinear x2 upsample (align_corners=True) as one lane-dense matmul:
    #    (C_x, HWin) @ (HWin, HWout), kept f32 for exact interpolation weights.
    up = jnp.dot(x_ref[0], up_ref[...], preferred_element_type=jnp.float32)

    # 2) Channel concat with the skip connection (in vregs, never hits HBM).
    xc = jnp.concatenate([skip_ref[0], up], axis=0)              # (C_in, HW)

    # 3) DoubleConv(Cin, Cin, residual=True)
    h = _gelu(_conv3x3_gn(xc, masks, w1_ref, g1_ref[...], b1_ref[...], W=W, eps=eps))
    r = _gelu(xc + _conv3x3_gn(h, masks, w2_ref, g2_ref[...], b2_ref[...], W=W, eps=eps))

    # 4) DoubleConv(Cin, Cout, mid=Cin//2)
    h = _gelu(_conv3x3_gn(r, masks, w3_ref, g3_ref[...], b3_ref[...], W=W, eps=eps))
    y = _conv3x3_gn(h, masks, w4_ref, g4_ref[...], b4_ref[...], W=W, eps=eps)

    # 5) emb_layer: Linear(SiLU(t)) broadcast-added over the spatial lanes.
    #    t is lane-dense (1, emb_dim); the C_out x emb_dim linear is a
    #    broadcast-multiply + lane reduce (avoids a degenerate N=1 matmul).
    silu_t = jax.nn.silu(t_ref[0])                               # (1, emb_dim)
    emb = jnp.sum(we_ref[...] * silu_t, axis=1, keepdims=True)   # (C_out, 1)
    o_ref[0] = y + emb + be_ref[...]


# --------------------------- pallas_call wrapper ------------------------------

def _bcast_spec(shape):
    zeros = (0,) * len(shape)
    return pl.BlockSpec(shape, lambda i: zeros)     # same block every grid step


def up_forward(params, x, skip_x, t):
    """Pallas forward of Up(in_channels, out_channels).forward(x, skip_x, t)."""
    B, c_x, H, W = x.shape
    c_skip = skip_x.shape[1]
    H2, W2 = 2 * H, 2 * W
    hw_in, hw_out = H * W, H2 * W2
    c_in = c_skip + c_x
    mid = c_in // 2
    c_out = params["w4"].shape[0]
    emb_dim = t.shape[1]

    kernel = functools.partial(_up_block_kernel, W=W2, eps=1e-5)

    out = pl.pallas_call(
        kernel,
        out_shape=jax.ShapeDtypeStruct((B, c_out, hw_out), jnp.float32),
        grid=(B,),
        in_specs=[
            pl.BlockSpec((1, c_x, hw_in), lambda i: (i, 0, 0)),      # x
            pl.BlockSpec((1, c_skip, hw_out), lambda i: (i, 0, 0)),  # skip
            pl.BlockSpec((1, 1, emb_dim), lambda i: (i, 0, 0)),      # t (lane-dense)
            _bcast_spec((hw_in, hw_out)),                            # up_mat
            _bcast_spec((9, hw_out)),                                # tap masks
            _bcast_spec((c_in, 9 * c_in)),                           # w1
            _bcast_spec((c_in, 1)), _bcast_spec((c_in, 1)),          # g1, b1
            _bcast_spec((c_in, 9 * c_in)),                           # w2
            _bcast_spec((c_in, 1)), _bcast_spec((c_in, 1)),          # g2, b2
            _bcast_spec((mid, 9 * c_in)),                            # w3
            _bcast_spec((mid, 1)), _bcast_spec((mid, 1)),            # g3, b3
            _bcast_spec((c_out, 9 * mid)),                           # w4
            _bcast_spec((c_out, 1)), _bcast_spec((c_out, 1)),        # g4, b4
            _bcast_spec((c_out, emb_dim)),                           # we
            _bcast_spec((c_out, 1)),                                 # be
        ],
        out_specs=pl.BlockSpec((1, c_out, hw_out), lambda i: (i, 0, 0)),
        compiler_params=pltpu.CompilerParams(
            dimension_semantics=("parallel",)),   # batch shards across TCs on v7x
    )(
        x.reshape(B, c_x, hw_in),
        skip_x.reshape(B, c_skip, hw_out),
        t.reshape(B, 1, emb_dim),
        params["up_mat"], params["masks"],
        params["w1"], params["g1"], params["b1"],
        params["w2"], params["g2"], params["b2"],
        params["w3"], params["g3"], params["b3"],
        params["w4"], params["g4"], params["b4"],
        params["we"], params["be"],
    )
    return out.reshape(B, c_out, H2, W2)


# ------------------------------ parameters ------------------------------------

def _interp_matrix(n_in, n_out):
    """1-D linear-interpolation matrix for bilinear resize, align_corners=True."""
    A = np.zeros((n_out, n_in), np.float32)
    if n_in == 1:
        A[:, 0] = 1.0
        return A
    scale = (n_in - 1) / (n_out - 1)
    for o in range(n_out):
        src = o * scale
        i0 = min(int(np.floor(src)), n_in - 2)
        w1 = src - i0
        A[o, i0] += 1.0 - w1
        A[o, i0 + 1] += w1
    return A


def _tap_masks(H, W):
    """(9, H*W) masks: mask[t, p]=1 iff the tap-t source pixel of p is in-bounds."""
    yy, xx = np.meshgrid(np.arange(H), np.arange(W), indexing="ij")
    yy = yy.reshape(-1)
    xx = xx.reshape(-1)
    m = np.zeros((9, H * W), np.float32)
    for t in range(9):
        oy, ox = t // 3 - 1, t % 3 - 1
        valid = ((yy + oy >= 0) & (yy + oy < H) &
                 (xx + ox >= 0) & (xx + ox < W))
        m[t] = valid.astype(np.float32)
    return m


def init_params(key, in_channels, out_channels, emb_dim, h_in, w_in):
    mid = in_channels // 2
    ks = jax.random.split(key, 6)

    def conv_w(k, c_out, c_in):
        # Stacked-tap 2-D layout (C_out, 9*C_in), bf16 (MXU operand dtype).
        # A real PyTorch port would use torch_w.permute(0,2,3,1).reshape(C_out,-1).
        s = 1.0 / np.sqrt(c_in * 9)
        w = jax.random.uniform(k, (c_out, 9 * c_in), jnp.float32, -s, s)
        return w.astype(jnp.bfloat16)

    p = {}
    # DoubleConv #1 (residual=True): Cin -> Cin -> Cin
    p["w1"] = conv_w(ks[0], in_channels, in_channels)
    p["g1"] = jnp.ones((in_channels, 1), jnp.float32)
    p["b1"] = jnp.zeros((in_channels, 1), jnp.float32)
    p["w2"] = conv_w(ks[1], in_channels, in_channels)
    p["g2"] = jnp.ones((in_channels, 1), jnp.float32)
    p["b2"] = jnp.zeros((in_channels, 1), jnp.float32)
    # DoubleConv #2: Cin -> Cin//2 -> Cout
    p["w3"] = conv_w(ks[2], mid, in_channels)
    p["g3"] = jnp.ones((mid, 1), jnp.float32)
    p["b3"] = jnp.zeros((mid, 1), jnp.float32)
    p["w4"] = conv_w(ks[3], out_channels, mid)
    p["g4"] = jnp.ones((out_channels, 1), jnp.float32)
    p["b4"] = jnp.zeros((out_channels, 1), jnp.float32)
    # emb_layer: SiLU -> Linear(emb_dim, out_channels)  (PyTorch (out, in) layout)
    se = 1.0 / np.sqrt(emb_dim)
    p["we"] = jax.random.uniform(ks[4], (out_channels, emb_dim), jnp.float32, -se, se)
    p["be"] = jax.random.uniform(ks[5], (out_channels, 1), jnp.float32, -se, se)
    # Bilinear x2 upsample operator: up_flat = x_flat @ kron(A_h, A_w)^T  (f32 exact)
    h2, w2 = 2 * h_in, 2 * w_in
    a_h = _interp_matrix(h_in, h2)
    a_w = _interp_matrix(w_in, w2)
    p["up_mat"] = jnp.asarray(np.kron(a_h, a_w).T, jnp.float32)
    # Precomputed 3x3 boundary masks at the upsampled resolution.
    p["masks"] = jnp.asarray(_tap_masks(h2, w2), jnp.float32)
    return p


# --------------------------------- main ---------------------------------------

if __name__ == "__main__":
    B = 2
    skip_channels, x_channels = 8, 8
    in_channels = skip_channels + x_channels       # channel count after concat
    out_channels = 8
    emb_dim = 128
    H, W = 8, 8                                    # x spatial; skip is (2H, 2W)

    key = jax.random.PRNGKey(0)
    kx, ksk, kt, kp = jax.random.split(key, 4)
    x = jax.random.normal(kx, (B, x_channels, H, W), jnp.float32)
    skip_x = jax.random.normal(ksk, (B, skip_channels, 2 * H, 2 * W), jnp.float32)
    t = jax.random.normal(kt, (B, emb_dim), jnp.float32)
    params = init_params(kp, in_channels, out_channels, emb_dim, H, W)

    fwd = jax.jit(up_forward)
    out = fwd(params, x, skip_x, t)
    jax.block_until_ready(out)

    assert out.shape == (B, out_channels, 2 * H, 2 * W), out.shape
    assert bool(jnp.all(jnp.isfinite(out)))
    print("KERNEL_OK")
</pallas_src>

<mosaic_0001>
module attributes {stable_mosaic.version = 11 : i64} {
  func.func @_up_block_kernel(%arg0: i32, %arg1: memref<1x8x64xf32, #tpu.memory_space<vmem>>, %arg2: memref<1x8x256xf32, #tpu.memory_space<vmem>>, %arg3: memref<1x1x128xf32, #tpu.memory_space<vmem>>, %arg4: memref<64x256xf32, #tpu.memory_space<vmem>>, %arg5: memref<9x256xf32, #tpu.memory_space<vmem>>, %arg6: memref<16x144xbf16, #tpu.memory_space<vmem>>, %arg7: memref<16x1xf32, #tpu.memory_space<vmem>>, %arg8: memref<16x1xf32, #tpu.memory_space<vmem>>, %arg9: memref<16x144xbf16, #tpu.memory_space<vmem>>, %arg10: memref<16x1xf32, #tpu.memory_space<vmem>>, %arg11: memref<16x1xf32, #tpu.memory_space<vmem>>, %arg12: memref<8x144xbf16, #tpu.memory_space<vmem>>, %arg13: memref<8x1xf32, #tpu.memory_space<vmem>>, %arg14: memref<8x1xf32, #tpu.memory_space<vmem>>, %arg15: memref<8x72xbf16, #tpu.memory_space<vmem>>, %arg16: memref<8x1xf32, #tpu.memory_space<vmem>>, %arg17: memref<8x1xf32, #tpu.memory_space<vmem>>, %arg18: memref<8x128xf32, #tpu.memory_space<vmem>>, %arg19: memref<8x1xf32, #tpu.memory_space<vmem>>, %arg20: memref<1x8x256xf32, #tpu.memory_space<vmem>>) attributes {dimension_semantics = [#tpu.dimension_semantics<parallel>], iteration_bounds = array<i64: 2>, scalar_prefetch = 0 : i64, scratch_operands = 0 : i64, tpu.core_type = #tpu.core_type<tc>, window_params = [{transform_indices = @transform_0, window_bounds = array<i64: 1, 8, 64>}, {transform_indices = @transform_1, window_bounds = array<i64: 1, 8, 256>}, {transform_indices = @transform_2, window_bounds = array<i64: 1, 1, 128>}, {pipeline_mode = #tpu.pipeline_mode<synchronous>, transform_indices = @transform_3, window_bounds = array<i64: 64, 256>}, {pipeline_mode = #tpu.pipeline_mode<synchronous>, transform_indices = @transform_4, window_bounds = array<i64: 9, 256>}, {pipeline_mode = #tpu.pipeline_mode<synchronous>, transform_indices = @transform_5, window_bounds = array<i64: 16, 144>}, {pipeline_mode = #tpu.pipeline_mode<synchronous>, transform_indices = @transform_6, window_bounds = array<i64: 16, 1>}, {pipeline_mode = #tpu.pipeline_mode<synchronous>, transform_indices = @transform_7, window_bounds = array<i64: 16, 1>}, {pipeline_mode = #tpu.pipeline_mode<synchronous>, transform_indices = @transform_8, window_bounds = array<i64: 16, 144>}, {pipeline_mode = #tpu.pipeline_mode<synchronous>, transform_indices = @transform_9, window_bounds = array<i64: 16, 1>}, {pipeline_mode = #tpu.pipeline_mode<synchronous>, transform_indices = @transform_10, window_bounds = array<i64: 16, 1>}, {pipeline_mode = #tpu.pipeline_mode<synchronous>, transform_indices = @transform_11, window_bounds = array<i64: 8, 144>}, {pipeline_mode = #tpu.pipeline_mode<synchronous>, transform_indices = @transform_12, window_bounds = array<i64: 8, 1>}, {pipeline_mode = #tpu.pipeline_mode<synchronous>, transform_indices = @transform_13, window_bounds = array<i64: 8, 1>}, {pipeline_mode = #tpu.pipeline_mode<synchronous>, transform_indices = @transform_14, window_bounds = array<i64: 8, 72>}, {pipeline_mode = #tpu.pipeline_mode<synchronous>, transform_indices = @transform_15, window_bounds = array<i64: 8, 1>}, {pipeline_mode = #tpu.pipeline_mode<synchronous>, transform_indices = @transform_16, window_bounds = array<i64: 8, 1>}, {pipeline_mode = #tpu.pipeline_mode<synchronous>, transform_indices = @transform_17, window_bounds = array<i64: 8, 128>}, {pipeline_mode = #tpu.pipeline_mode<synchronous>, transform_indices = @transform_18, window_bounds = array<i64: 8, 1>}, {transform_indices = @transform_19, window_bounds = array<i64: 1, 8, 256>}]} {
    %c0 = arith.constant 0 : index
    %c0_0 = arith.constant 0 : index
    %0 = vector.load %arg5[%c0, %c0_0] : memref<9x256xf32, #tpu.memory_space<vmem>>, vector<9x256xf32>
    %c0_1 = arith.constant 0 : index
    %c0_2 = arith.constant 0 : index
    %c0_3 = arith.constant 0 : index
    %1 = vector.load %arg1[%c0_1, %c0_2, %c0_3] : memref<1x8x64xf32, #tpu.memory_space<vmem>>, vector<1x8x64xf32>
    %2 = vector.shape_cast %1 : vector<1x8x64xf32> to vector<8x64xf32>
    %c0_4 = arith.constant 0 : index
    %c0_5 = arith.constant 0 : index
    %3 = vector.load %arg4[%c0_4, %c0_5] : memref<64x256xf32, #tpu.memory_space<vmem>>, vector<64x256xf32>
    %cst = arith.constant dense<0.000000e+00> : vector<8x256xf32>
    %4 = tpu.matmul %2, %3, %cst {dimension_numbers = #tpu.dot_dimension_numbers<[1], [0], [0], [1], [0, 0, 1, 1], [], []>} : vector<8x64xf32>, vector<64x256xf32>, vector<8x256xf32> -> vector<8x256xf32>
    %c0_6 = arith.constant 0 : index
    %c0_7 = arith.constant 0 : index
    %c0_8 = arith.constant 0 : index
    %5 = vector.load %arg2[%c0_6, %c0_7, %c0_8] : memref<1x8x256xf32, #tpu.memory_space<vmem>>, vector<1x8x256xf32>
    %6 = vector.shape_cast %5 : vector<1x8x256xf32> to vector<8x256xf32>
    %7 = tpu.concatenate %6, %4 in 0 : vector<8x256xf32>, vector<8x256xf32> -> vector<16x256xf32>
    %c0_9 = arith.constant 0 : index
    %c0_10 = arith.constant 0 : index
    %8 = vector.load %arg7[%c0_9, %c0_10] : memref<16x1xf32, #tpu.memory_space<vmem>>, vector<16x1xf32>
    %c0_11 = arith.constant 0 : index
    %c0_12 = arith.constant 0 : index
    %9 = vector.load %arg8[%c0_11, %c0_12] : memref<16x1xf32, #tpu.memory_space<vmem>>, vector<16x1xf32>
    %c17_i32 = arith.constant 17 : i32
    %10 = tpu.dynamic_rotate %7 by %c17_i32 dim 1 : vector<16x256xf32>, i32 -> vector<16x256xf32>
    %11 = vector.extract_strided_slice %0 {offsets = [0, 0], sizes = [1, 256], strides = [1, 1]} : vector<9x256xf32> to vector<1x256xf32>
    %12 = vector.broadcast %11 : vector<1x256xf32> to vector<16x256xf32>
    %13 = arith.mulf %10, %12 : vector<16x256xf32>
    %c16_i32 = arith.constant 16 : i32
    %14 = tpu.dynamic_rotate %7 by %c16_i32 dim 1 : vector<16x256xf32>, i32 -> vector<16x256xf32>
    %15 = vector.extract_strided_slice %0 {offsets = [1, 0], sizes = [1, 256], strides = [1, 1]} : vector<9x256xf32> to vector<1x256xf32>
    %16 = vector.broadcast %15 : vector<1x256xf32> to vector<16x256xf32>
    %17 = arith.mulf %14, %16 : vector<16x256xf32>
    %c15_i32 = arith.constant 15 : i32
    %18 = tpu.dynamic_rotate %7 by %c15_i32 dim 1 : vector<16x256xf32>, i32 -> vector<16x256xf32>
    %19 = vector.extract_strided_slice %0 {offsets = [2, 0], sizes = [1, 256], strides = [1, 1]} : vector<9x256xf32> to vector<1x256xf32>
    %20 = vector.broadcast %19 : vector<1x256xf32> to vector<16x256xf32>
    %21 = arith.mulf %18, %20 : vector<16x256xf32>
    %c1_i32 = arith.constant 1 : i32
    %22 = tpu.dynamic_rotate %7 by %c1_i32 dim 1 : vector<16x256xf32>, i32 -> vector<16x256xf32>
    %23 = vector.extract_strided_slice %0 {offsets = [3, 0], sizes = [1, 256], strides = [1, 1]} : vector<9x256xf32> to vector<1x256xf32>
    %24 = vector.broadcast %23 : vector<1x256xf32> to vector<16x256xf32>
    %25 = arith.mulf %22, %24 : vector<16x256xf32>
    %c255_i32 = arith.constant 255 : i32
    %26 = tpu.dynamic_rotate %7 by %c255_i32 dim 1 : vector<16x256xf32>, i32 -> vector<16x256xf32>
    %27 = vector.extract_strided_slice %0 {offsets = [5, 0], sizes = [1, 256], strides = [1, 1]} : vector<9x256xf32> to vector<1x256xf32>
    %28 = vector.broadcast %27 : vector<1x256xf32> to vector<16x256xf32>
    %29 = arith.mulf %26, %28 : vector<16x256xf32>
    %c241_i32 = arith.constant 241 : i32
    %30 = tpu.dynamic_rotate %7 by %c241_i32 dim 1 : vector<16x256xf32>, i32 -> vector<16x256xf32>
    %31 = vector.extract_strided_slice %0 {offsets = [6, 0], sizes = [1, 256], strides = [1, 1]} : vector<9x256xf32> to vector<1x256xf32>
    %32 = vector.broadcast %31 : vector<1x256xf32> to vector<16x256xf32>
    %33 = arith.mulf %30, %32 : vector<16x256xf32>
    %c240_i32 = arith.constant 240 : i32
    %34 = tpu.dynamic_rotate %7 by %c240_i32 dim 1 : vector<16x256xf32>, i32 -> vector<16x256xf32>
    %35 = vector.extract_strided_slice %0 {offsets = [7, 0], sizes = [1, 256], strides = [1, 1]} : vector<9x256xf32> to vector<1x256xf32>
    %36 = vector.broadcast %35 : vector<1x256xf32> to vector<16x256xf32>
    %37 = arith.mulf %34, %36 : vector<16x256xf32>
    %c239_i32 = arith.constant 239 : i32
    %38 = tpu.dynamic_rotate %7 by %c239_i32 dim 1 : vector<16x256xf32>, i32 -> vector<16x256xf32>
    %39 = vector.extract_strided_slice %0 {offsets = [8, 0], sizes = [1, 256], strides = [1, 1]} : vector<9x256xf32> to vector<1x256xf32>
    %40 = vector.broadcast %39 : vector<1x256xf32> to vector<16x256xf32>
    %41 = arith.mulf %38, %40 : vector<16x256xf32>
    %42 = tpu.concatenate %13, %17, %21, %25, %7, %29, %33, %37, %41 in 0 : vector<16x256xf32>, vector<16x256xf32>, vector<16x256xf32>, vector<16x256xf32>, vector<16x256xf32>, vector<16x256xf32>, vector<16x256xf32>, vector<16x256xf32>, vector<16x256xf32> -> vector<144x256xf32>
    %43 = arith.truncf %42 : vector<144x256xf32> to vector<144x256xbf16>
    %c0_13 = arith.constant 0 : index
    %c0_14 = arith.constant 0 : index
    %44 = vector.load %arg6[%c0_13, %c0_14] : memref<16x144xbf16, #tpu.memory_space<vmem>>, vector<16x144xbf16>
    %cst_15 = arith.constant dense<0.000000e+00> : vector<16x256xf32>
    %45 = tpu.matmul %44, %43, %cst_15 {dimension_numbers = #tpu.dot_dimension_numbers<[1], [0], [0], [1], [0, 0, 1, 1], [], []>} : vector<16x144xbf16>, vector<144x256xbf16>, vector<16x256xf32> -> vector<16x256xf32>
    %cst_16 = arith.constant dense<0.000000e+00> : vector<16xf32>
    %46 = vector.multi_reduction <add>, %45, %cst_16 [1] : vector<16x256xf32> to vector<16xf32>
    %47 = vector.shape_cast %46 : vector<16xf32> to vector<16x1xf32>
    %cst_17 = arith.constant 2.560000e+02 : f32
    %48 = vector.broadcast %cst_17 : f32 to vector<16x1xf32>
    %49 = arith.divf %47, %48 : vector<16x1xf32>
    %cst_18 = arith.constant dense<0.000000e+00> : vector<1xf32>
    %50 = vector.multi_reduction <add>, %49, %cst_18 [0] : vector<16x1xf32> to vector<1xf32>
    %51 = vector.shape_cast %50 : vector<1xf32> to vector<1x1xf32>
    %cst_19 = arith.constant 1.600000e+01 : f32
    %52 = vector.broadcast %cst_19 : f32 to vector<1x1xf32>
    %53 = arith.divf %51, %52 : vector<1x1xf32>
    %54 = vector.broadcast %53 : vector<1x1xf32> to vector<16x256xf32>
    %55 = arith.subf %45, %54 : vector<16x256xf32>
    %56 = arith.mulf %55, %55 : vector<16x256xf32>
    %cst_20 = arith.constant dense<0.000000e+00> : vector<16xf32>
    %57 = vector.multi_reduction <add>, %56, %cst_20 [1] : vector<16x256xf32> to vector<16xf32>
    %58 = vector.shape_cast %57 : vector<16xf32> to vector<16x1xf32>
    %cst_21 = arith.constant 2.560000e+02 : f32
    %59 = vector.broadcast %cst_21 : f32 to vector<16x1xf32>
    %60 = arith.divf %58, %59 : vector<16x1xf32>
    %cst_22 = arith.constant dense<0.000000e+00> : vector<1xf32>
    %61 = vector.multi_reduction <add>, %60, %cst_22 [0] : vector<16x1xf32> to vector<1xf32>
    %62 = vector.shape_cast %61 : vector<1xf32> to vector<1x1xf32>
    %cst_23 = arith.constant 1.600000e+01 : f32
    %63 = vector.broadcast %cst_23 : f32 to vector<1x1xf32>
    %64 = arith.divf %62, %63 : vector<1x1xf32>
    %cst_24 = arith.constant 9.99999974E-6 : f32
    %65 = vector.broadcast %cst_24 : f32 to vector<1x1xf32>
    %66 = arith.addf %64, %65 : vector<1x1xf32>
    %67 = math.rsqrt %66 : vector<1x1xf32>
    %68 = vector.broadcast %67 : vector<1x1xf32> to vector<16x256xf32>
    %69 = arith.mulf %55, %68 : vector<16x256xf32>
    %70 = vector.broadcast %8 : vector<16x1xf32> to vector<16x256xf32>
    %71 = arith.mulf %69, %70 : vector<16x256xf32>
    %72 = vector.broadcast %9 : vector<16x1xf32> to vector<16x256xf32>
    %73 = arith.addf %71, %72 : vector<16x256xf32>
    %74 = arith.mulf %73, %73 : vector<16x256xf32>
    %75 = arith.mulf %73, %74 : vector<16x256xf32>
    %cst_25 = arith.constant 4.471500e-02 : f32
    %76 = vector.broadcast %cst_25 : f32 to vector<16x256xf32>
    %77 = arith.mulf %76, %75 : vector<16x256xf32>
    %78 = arith.addf %73, %77 : vector<16x256xf32>
    %cst_26 = arith.constant 0.797884583 : f32
    %79 = vector.broadcast %cst_26 : f32 to vector<16x256xf32>
    %80 = arith.mulf %79, %78 : vector<16x256xf32>
    %81 = math.tanh %80 : vector<16x256xf32>
    %cst_27 = arith.constant 1.000000e+00 : f32
    %82 = vector.broadcast %cst_27 : f32 to vector<16x256xf32>
    %83 = arith.addf %82, %81 : vector<16x256xf32>
    %cst_28 = arith.constant 5.000000e-01 : f32
    %84 = vector.broadcast %cst_28 : f32 to vector<16x256xf32>
    %85 = arith.mulf %84, %83 : vector<16x256xf32>
    %86 = arith.mulf %73, %85 : vector<16x256xf32>
    %c0_29 = arith.constant 0 : index
    %c0_30 = arith.constant 0 : index
    %87 = vector.load %arg10[%c0_29, %c0_30] : memref<16x1xf32, #tpu.memory_space<vmem>>, vector<16x1xf32>
    %c0_31 = arith.constant 0 : index
    %c0_32 = arith.constant 0 : index
    %88 = vector.load %arg11[%c0_31, %c0_32] : memref<16x1xf32, #tpu.memory_space<vmem>>, vector<16x1xf32>
    %c17_i32_33 = arith.constant 17 : i32
    %89 = tpu.dynamic_rotate %86 by %c17_i32_33 dim 1 : vector<16x256xf32>, i32 -> vector<16x256xf32>
    %90 = vector.extract_strided_slice %0 {offsets = [0, 0], sizes = [1, 256], strides = [1, 1]} : vector<9x256xf32> to vector<1x256xf32>
    %91 = vector.broadcast %90 : vector<1x256xf32> to vector<16x256xf32>
    %92 = arith.mulf %89, %91 : vector<16x256xf32>
    %c16_i32_34 = arith.constant 16 : i32
    %93 = tpu.dynamic_rotate %86 by %c16_i32_34 dim 1 : vector<16x256xf32>, i32 -> vector<16x256xf32>
    %94 = vector.extract_strided_slice %0 {offsets = [1, 0], sizes = [1, 256], strides = [1, 1]} : vector<9x256xf32> to vector<1x256xf32>
    %95 = vector.broadcast %94 : vector<1x256xf32> to vector<16x256xf32>
    %96 = arith.mulf %93, %95 : vector<16x256xf32>
    %c15_i32_35 = arith.constant 15 : i32
    %97 = tpu.dynamic_rotate %86 by %c15_i32_35 dim 1 : vector<16x256xf32>, i32 -> vector<16x256xf32>
    %98 = vector.extract_strided_slice %0 {offsets = [2, 0], sizes = [1, 256], strides = [1, 1]} : vector<9x256xf32> to vector<1x256xf32>
    %99 = vector.broadcast %98 : vector<1x256xf32> to vector<16x256xf32>
    %100 = arith.mulf %97, %99 : vector<16x256xf32>
    %c1_i32_36 = arith.constant 1 : i32
    %101 = tpu.dynamic_rotate %86 by %c1_i32_36 dim 1 : vector<16x256xf32>, i32 -> vector<16x256xf32>
    %102 = vector.extract_strided_slice %0 {offsets = [3, 0], sizes = [1, 256], strides = [1, 1]} : vector<9x256xf32> to vector<1x256xf32>
    %103 = vector.broadcast %102 : vector<1x256xf32> to vector<16x256xf32>
    %104 = arith.mulf %101, %103 : vector<16x256xf32>
    %c255_i32_37 = arith.constant 255 : i32
    %105 = tpu.dynamic_rotate %86 by %c255_i32_37 dim 1 : vector<16x256xf32>, i32 -> vector<16x256xf32>
    %106 = vector.extract_strided_slice %0 {offsets = [5, 0], sizes = [1, 256], strides = [1, 1]} : vector<9x256xf32> to vector<1x256xf32>
    %107 = vector.broadcast %106 : vector<1x256xf32> to vector<16x256xf32>
    %108 = arith.mulf %105, %107 : vector<16x256xf32>
    %c241_i32_38 = arith.constant 241 : i32
    %109 = tpu.dynamic_rotate %86 by %c241_i32_38 dim 1 : vector<16x256xf32>, i32 -> vector<16x256xf32>
    %110 = vector.extract_strided_slice %0 {offsets = [6, 0], sizes = [1, 256], strides = [1, 1]} : vector<9x256xf32> to vector<1x256xf32>
    %111 = vector.broadcast %110 : vector<1x256xf32> to vector<16x256xf32>
    %112 = arith.mulf %109, %111 : vector<16x256xf32>
    %c240_i32_39 = arith.constant 240 : i32
    %113 = tpu.dynamic_rotate %86 by %c240_i32_39 dim 1 : vector<16x256xf32>, i32 -> vector<16x256xf32>
    %114 = vector.extract_strided_slice %0 {offsets = [7, 0], sizes = [1, 256], strides = [1, 1]} : vector<9x256xf32> to vector<1x256xf32>
    %115 = vector.broadcast %114 : vector<1x256xf32> to vector<16x256xf32>
    %116 = arith.mulf %113, %115 : vector<16x256xf32>
    %c239_i32_40 = arith.constant 239 : i32
    %117 = tpu.dynamic_rotate %86 by %c239_i32_40 dim 1 : vector<16x256xf32>, i32 -> vector<16x256xf32>
    %118 = vector.extract_strided_slice %0 {offsets = [8, 0], sizes = [1, 256], strides = [1, 1]} : vector<9x256xf32> to vector<1x256xf32>
    %119 = vector.broadcast %118 : vector<1x256xf32> to vector<16x256xf32>
    %120 = arith.mulf %117, %119 : vector<16x256xf32>
    %121 = tpu.concatenate %92, %96, %100, %104, %86, %108, %112, %116, %120 in 0 : vector<16x256xf32>, vector<16x256xf32>, vector<16x256xf32>, vector<16x256xf32>, vector<16x256xf32>, vector<16x256xf32>, vector<16x256xf32>, vector<16x256xf32>, vector<16x256xf32> -> vector<144x256xf32>
    %122 = arith.truncf %121 : vector<144x256xf32> to vector<144x256xbf16>
    %c0_41 = arith.constant 0 : index
    %c0_42 = arith.constant 0 : index
    %123 = vector.load %arg9[%c0_41, %c0_42] : memref<16x144xbf16, #tpu.memory_space<vmem>>, vector<16x144xbf16>
    %cst_43 = arith.constant dense<0.000000e+00> : vector<16x256xf32>
    %124 = tpu.matmul %123, %122, %cst_43 {dimension_numbers = #tpu.dot_dimension_numbers<[1], [0], [0], [1], [0, 0, 1, 1], [], []>} : vector<16x144xbf16>, vector<144x256xbf16>, vector<16x256xf32> -> vector<16x256xf32>
    %cst_44 = arith.constant dense<0.000000e+00> : vector<16xf32>
    %125 = vector.multi_reduction <add>, %124, %cst_44 [1] : vector<16x256xf32> to vector<16xf32>
    %126 = vector.shape_cast %125 : vector<16xf32> to vector<16x1xf32>
    %cst_45 = arith.constant 2.560000e+02 : f32
    %127 = vector.broadcast %cst_45 : f32 to vector<16x1xf32>
    %128 = arith.divf %126, %127 : vector<16x1xf32>
    %cst_46 = arith.constant dense<0.000000e+00> : vector<1xf32>
    %129 = vector.multi_reduction <add>, %128, %cst_46 [0] : vector<16x1xf32> to vector<1xf32>
    %130 = vector.shape_cast %129 : vector<1xf32> to vector<1x1xf32>
    %cst_47 = arith.constant 1.600000e+01 : f32
    %131 = vector.broadcast %cst_47 : f32 to vector<1x1xf32>
    %132 = arith.divf %130, %131 : vector<1x1xf32>
    %133 = vector.broadcast %132 : vector<1x1xf32> to vector<16x256xf32>
    %134 = arith.subf %124, %133 : vector<16x256xf32>
    %135 = arith.mulf %134, %134 : vector<16x256xf32>
    %cst_48 = arith.constant dense<0.000000e+00> : vector<16xf32>
    %136 = vector.multi_reduction <add>, %135, %cst_48 [1] : vector<16x256xf32> to vector<16xf32>
    %137 = vector.shape_cast %136 : vector<16xf32> to vector<16x1xf32>
    %cst_49 = arith.constant 2.560000e+02 : f32
    %138 = vector.broadcast %cst_49 : f32 to vector<16x1xf32>
    %139 = arith.divf %137, %138 : vector<16x1xf32>
    %cst_50 = arith.constant dense<0.000000e+00> : vector<1xf32>
    %140 = vector.multi_reduction <add>, %139, %cst_50 [0] : vector<16x1xf32> to vector<1xf32>
    %141 = vector.shape_cast %140 : vector<1xf32> to vector<1x1xf32>
    %cst_51 = arith.constant 1.600000e+01 : f32
    %142 = vector.broadcast %cst_51 : f32 to vector<1x1xf32>
    %143 = arith.divf %141, %142 : vector<1x1xf32>
    %cst_52 = arith.constant 9.99999974E-6 : f32
    %144 = vector.broadcast %cst_52 : f32 to vector<1x1xf32>
    %145 = arith.addf %143, %144 : vector<1x1xf32>
    %146 = math.rsqrt %145 : vector<1x1xf32>
    %147 = vector.broadcast %146 : vector<1x1xf32> to vector<16x256xf32>
    %148 = arith.mulf %134, %147 : vector<16x256xf32>
    %149 = vector.broadcast %87 : vector<16x1xf32> to vector<16x256xf32>
    %150 = arith.mulf %148, %149 : vector<16x256xf32>
    %151 = vector.broadcast %88 : vector<16x1xf32> to vector<16x256xf32>
    %152 = arith.addf %150, %151 : vector<16x256xf32>
    %153 = arith.addf %7, %152 : vector<16x256xf32>
    %154 = arith.mulf %153, %153 : vector<16x256xf32>
    %155 = arith.mulf %153, %154 : vector<16x256xf32>
    %cst_53 = arith.constant 4.471500e-02 : f32
    %156 = vector.broadcast %cst_53 : f32 to vector<16x256xf32>
    %157 = arith.mulf %156, %155 : vector<16x256xf32>
    %158 = arith.addf %153, %157 : vector<16x256xf32>
    %cst_54 = arith.constant 0.797884583 : f32
    %159 = vector.broadcast %cst_54 : f32 to vector<16x256xf32>
    %160 = arith.mulf %159, %158 : vector<16x256xf32>
    %161 = math.tanh %160 : vector<16x256xf32>
    %cst_55 = arith.constant 1.000000e+00 : f32
    %162 = vector.broadcast %cst_55 : f32 to vector<16x256xf32>
    %163 = arith.addf %162, %161 : vector<16x256xf32>
    %cst_56 = arith.constant 5.000000e-01 : f32
    %164 = vector.broadcast %cst_56 : f32 to vector<16x256xf32>
    %165 = arith.mulf %164, %163 : vector<16x256xf32>
    %166 = arith.mulf %153, %165 : vector<16x256xf32>
    %c0_57 = arith.constant 0 : index
    %c0_58 = arith.constant 0 : index
    %167 = vector.load %arg13[%c0_57, %c0_58] : memref<8x1xf32, #tpu.memory_space<vmem>>, vector<8x1xf32>
    %c0_59 = arith.constant 0 : index
    %c0_60 = arith.constant 0 : index
    %168 = vector.load %arg14[%c0_59, %c0_60] : memref<8x1xf32, #tpu.memory_space<vmem>>, vector<8x1xf32>
    %c17_i32_61 = arith.constant 17 : i32
    %169 = tpu.dynamic_rotate %166 by %c17_i32_61 dim 1 : vector<16x256xf32>, i32 -> vector<16x256xf32>
    %170 = vector.extract_strided_slice %0 {offsets = [0, 0], sizes = [1, 256], strides = [1, 1]} : vector<9x256xf32> to vector<1x256xf32>
    %171 = vector.broadcast %170 : vector<1x256xf32> to vector<16x256xf32>
    %172 = arith.mulf %169, %171 : vector<16x256xf32>
    %c16_i32_62 = arith.constant 16 : i32
    %173 = tpu.dynamic_rotate %166 by %c16_i32_62 dim 1 : vector<16x256xf32>, i32 -> vector<16x256xf32>
    %174 = vector.extract_strided_slice %0 {offsets = [1, 0], sizes = [1, 256], strides = [1, 1]} : vector<9x256xf32> to vector<1x256xf32>
    %175 = vector.broadcast %174 : vector<1x256xf32> to vector<16x256xf32>
    %176 = arith.mulf %173, %175 : vector<16x256xf32>
    %c15_i32_63 = arith.constant 15 : i32
    %177 = tpu.dynamic_rotate %166 by %c15_i32_63 dim 1 : vector<16x256xf32>, i32 -> vector<16x256xf32>
    %178 = vector.extract_strided_slice %0 {offsets = [2, 0], sizes = [1, 256], strides = [1, 1]} : vector<9x256xf32> to vector<1x256xf32>
    %179 = vector.broadcast %178 : vector<1x256xf32> to vector<16x256xf32>
    %180 = arith.mulf %177, %179 : vector<16x256xf32>
    %c1_i32_64 = arith.constant 1 : i32
    %181 = tpu.dynamic_rotate %166 by %c1_i32_64 dim 1 : vector<16x256xf32>, i32 -> vector<16x256xf32>
    %182 = vector.extract_strided_slice %0 {offsets = [3, 0], sizes = [1, 256], strides = [1, 1]} : vector<9x256xf32> to vector<1x256xf32>
    %183 = vector.broadcast %182 : vector<1x256xf32> to vector<16x256xf32>
    %184 = arith.mulf %181, %183 : vector<16x256xf32>
    %c255_i32_65 = arith.constant 255 : i32
    %185 = tpu.dynamic_rotate %166 by %c255_i32_65 dim 1 : vector<16x256xf32>, i32 -> vector<16x256xf32>
    %186 = vector.extract_strided_slice %0 {offsets = [5, 0], sizes = [1, 256], strides = [1, 1]} : vector<9x256xf32> to vector<1x256xf32>
    %187 = vector.broadcast %186 : vector<1x256xf32> to vector<16x256xf32>
    %188 = arith.mulf %185, %187 : vector<16x256xf32>
    %c241_i32_66 = arith.constant 241 : i32
    %189 = tpu.dynamic_rotate %166 by %c241_i32_66 dim 1 : vector<16x256xf32>, i32 -> vector<16x256xf32>
    %190 = vector.extract_strided_slice %0 {offsets = [6, 0], sizes = [1, 256], strides = [1, 1]} : vector<9x256xf32> to vector<1x256xf32>
    %191 = vector.broadcast %190 : vector<1x256xf32> to vector<16x256xf32>
    %192 = arith.mulf %189, %191 : vector<16x256xf32>
    %c240_i32_67 = arith.constant 240 : i32
    %193 = tpu.dynamic_rotate %166 by %c240_i32_67 dim 1 : vector<16x256xf32>, i32 -> vector<16x256xf32>
    %194 = vector.extract_strided_slice %0 {offsets = [7, 0], sizes = [1, 256], strides = [1, 1]} : vector<9x256xf32> to vector<1x256xf32>
    %195 = vector.broadcast %194 : vector<1x256xf32> to vector<16x256xf32>
    %196 = arith.mulf %193, %195 : vector<16x256xf32>
    %c239_i32_68 = arith.constant 239 : i32
    %197 = tpu.dynamic_rotate %166 by %c239_i32_68 dim 1 : vector<16x256xf32>, i32 -> vector<16x256xf32>
    %198 = vector.extract_strided_slice %0 {offsets = [8, 0], sizes = [1, 256], strides = [1, 1]} : vector<9x256xf32> to vector<1x256xf32>
    %199 = vector.broadcast %198 : vector<1x256xf32> to vector<16x256xf32>
    %200 = arith.mulf %197, %199 : vector<16x256xf32>
    %201 = tpu.concatenate %172, %176, %180, %184, %166, %188, %192, %196, %200 in 0 : vector<16x256xf32>, vector<16x256xf32>, vector<16x256xf32>, vector<16x256xf32>, vector<16x256xf32>, vector<16x256xf32>, vector<16x256xf32>, vector<16x256xf32>, vector<16x256xf32> -> vector<144x256xf32>
    %202 = arith.truncf %201 : vector<144x256xf32> to vector<144x256xbf16>
    %c0_69 = arith.constant 0 : index
    %c0_70 = arith.constant 0 : index
    %203 = vector.load %arg12[%c0_69, %c0_70] : memref<8x144xbf16, #tpu.memory_space<vmem>>, vector<8x144xbf16>
    %cst_71 = arith.constant dense<0.000000e+00> : vector<8x256xf32>
    %204 = tpu.matmul %203, %202, %cst_71 {dimension_numbers = #tpu.dot_dimension_numbers<[1], [0], [0], [1], [0, 0, 1, 1], [], []>} : vector<8x144xbf16>, vector<144x256xbf16>, vector<8x256xf32> -> vector<8x256xf32>
    %cst_72 = arith.constant dense<0.000000e+00> : vector<8xf32>
    %205 = vector.multi_reduction <add>, %204, %cst_72 [1] : vector<8x256xf32> to vector<8xf32>
    %206 = vector.shape_cast %205 : vector<8xf32> to vector<8x1xf32>
    %cst_73 = arith.constant 2.560000e+02 : f32
    %207 = vector.broadcast %cst_73 : f32 to vector<8x1xf32>
    %208 = arith.divf %206, %207 : vector<8x1xf32>
    %cst_74 = arith.constant dense<0.000000e+00> : vector<1xf32>
    %209 = vector.multi_reduction <add>, %208, %cst_74 [0] : vector<8x1xf32> to vector<1xf32>
    %210 = vector.shape_cast %209 : vector<1xf32> to vector<1x1xf32>
    %cst_75 = arith.constant 8.000000e+00 : f32
    %211 = vector.broadcast %cst_75 : f32 to vector<1x1xf32>
    %212 = arith.divf %210, %211 : vector<1x1xf32>
    %213 = vector.broadcast %212 : vector<1x1xf32> to vector<8x256xf32>
    %214 = arith.subf %204, %213 : vector<8x256xf32>
    %215 = arith.mulf %214, %214 : vector<8x256xf32>
    %cst_76 = arith.constant dense<0.000000e+00> : vector<8xf32>
    %216 = vector.multi_reduction <add>, %215, %cst_76 [1] : vector<8x256xf32> to vector<8xf32>
    %217 = vector.shape_cast %216 : vector<8xf32> to vector<8x1xf32>
    %cst_77 = arith.constant 2.560000e+02 : f32
    %218 = vector.broadcast %cst_77 : f32 to vector<8x1xf32>
    %219 = arith.divf %217, %218 : vector<8x1xf32>
    %cst_78 = arith.constant dense<0.000000e+00> : vector<1xf32>
    %220 = vector.multi_reduction <add>, %219, %cst_78 [0] : vector<8x1xf32> to vector<1xf32>
    %221 = vector.shape_cast %220 : vector<1xf32> to vector<1x1xf32>
    %cst_79 = arith.constant 8.000000e+00 : f32
    %222 = vector.broadcast %cst_79 : f32 to vector<1x1xf32>
    %223 = arith.divf %221, %222 : vector<1x1xf32>
    %cst_80 = arith.constant 9.99999974E-6 : f32
    %224 = vector.broadcast %cst_80 : f32 to vector<1x1xf32>
    %225 = arith.addf %223, %224 : vector<1x1xf32>
    %226 = math.rsqrt %225 : vector<1x1xf32>
    %227 = vector.broadcast %226 : vector<1x1xf32> to vector<8x256xf32>
    %228 = arith.mulf %214, %227 : vector<8x256xf32>
    %229 = vector.broadcast %167 : vector<8x1xf32> to vector<8x256xf32>
    %230 = arith.mulf %228, %229 : vector<8x256xf32>
    %231 = vector.broadcast %168 : vector<8x1xf32> to vector<8x256xf32>
    %232 = arith.addf %230, %231 : vector<8x256xf32>
    %233 = arith.mulf %232, %232 : vector<8x256xf32>
    %234 = arith.mulf %232, %233 : vector<8x256xf32>
    %cst_81 = arith.constant 4.471500e-02 : f32
    %235 = vector.broadcast %cst_81 : f32 to vector<8x256xf32>
    %236 = arith.mulf %235, %234 : vector<8x256xf32>
    %237 = arith.addf %232, %236 : vector<8x256xf32>
    %cst_82 = arith.constant 0.797884583 : f32
    %238 = vector.broadcast %cst_82 : f32 to vector<8x256xf32>
    %239 = arith.mulf %238, %237 : vector<8x256xf32>
    %240 = math.tanh %239 : vector<8x256xf32>
    %cst_83 = arith.constant 1.000000e+00 : f32
    %241 = vector.broadcast %cst_83 : f32 to vector<8x256xf32>
    %242 = arith.addf %241, %240 : vector<8x256xf32>
    %cst_84 = arith.constant 5.000000e-01 : f32
    %243 = vector.broadcast %cst_84 : f32 to vector<8x256xf32>
    %244 = arith.mulf %243, %242 : vector<8x256xf32>
    %245 = arith.mulf %232, %244 : vector<8x256xf32>
    %c0_85 = arith.constant 0 : index
    %c0_86 = arith.constant 0 : index
    %246 = vector.load %arg16[%c0_85, %c0_86] : memref<8x1xf32, #tpu.memory_space<vmem>>, vector<8x1xf32>
    %c0_87 = arith.constant 0 : index
    %c0_88 = arith.constant 0 : index
    %247 = vector.load %arg17[%c0_87, %c0_88] : memref<8x1xf32, #tpu.memory_space<vmem>>, vector<8x1xf32>
    %c17_i32_89 = arith.constant 17 : i32
    %248 = tpu.dynamic_rotate %245 by %c17_i32_89 dim 1 : vector<8x256xf32>, i32 -> vector<8x256xf32>
    %249 = vector.extract_strided_slice %0 {offsets = [0, 0], sizes = [1, 256], strides = [1, 1]} : vector<9x256xf32> to vector<1x256xf32>
    %250 = vector.broadcast %249 : vector<1x256xf32> to vector<8x256xf32>
    %251 = arith.mulf %248, %250 : vector<8x256xf32>
    %c16_i32_90 = arith.constant 16 : i32
    %252 = tpu.dynamic_rotate %245 by %c16_i32_90 dim 1 : vector<8x256xf32>, i32 -> vector<8x256xf32>
    %253 = vector.extract_strided_slice %0 {offsets = [1, 0], sizes = [1, 256], strides = [1, 1]} : vector<9x256xf32> to vector<1x256xf32>
    %254 = vector.broadcast %253 : vector<1x256xf32> to vector<8x256xf32>
    %255 = arith.mulf %252, %254 : vector<8x256xf32>
    %c15_i32_91 = arith.constant 15 : i32
    %256 = tpu.dynamic_rotate %245 by %c15_i32_91 dim 1 : vector<8x256xf32>, i32 -> vector<8x256xf32>
    %257 = vector.extract_strided_slice %0 {offsets = [2, 0], sizes = [1, 256], strides = [1, 1]} : vector<9x256xf32> to vector<1x256xf32>
    %258 = vector.broadcast %257 : vector<1x256xf32> to vector<8x256xf32>
    %259 = arith.mulf %256, %258 : vector<8x256xf32>
    %c1_i32_92 = arith.constant 1 : i32
    %260 = tpu.dynamic_rotate %245 by %c1_i32_92 dim 1 : vector<8x256xf32>, i32 -> vector<8x256xf32>
    %261 = vector.extract_strided_slice %0 {offsets = [3, 0], sizes = [1, 256], strides = [1, 1]} : vector<9x256xf32> to vector<1x256xf32>
    %262 = vector.broadcast %261 : vector<1x256xf32> to vector<8x256xf32>
    %263 = arith.mulf %260, %262 : vector<8x256xf32>
    %c255_i32_93 = arith.constant 255 : i32
    %264 = tpu.dynamic_rotate %245 by %c255_i32_93 dim 1 : vector<8x256xf32>, i32 -> vector<8x256xf32>
    %265 = vector.extract_strided_slice %0 {offsets = [5, 0], sizes = [1, 256], strides = [1, 1]} : vector<9x256xf32> to vector<1x256xf32>
    %266 = vector.broadcast %265 : vector<1x256xf32> to vector<8x256xf32>
    %267 = arith.mulf %264, %266 : vector<8x256xf32>
    %c241_i32_94 = arith.constant 241 : i32
    %268 = tpu.dynamic_rotate %245 by %c241_i32_94 dim 1 : vector<8x256xf32>, i32 -> vector<8x256xf32>
    %269 = vector.extract_strided_slice %0 {offsets = [6, 0], sizes = [1, 256], strides = [1, 1]} : vector<9x256xf32> to vector<1x256xf32>
    %270 = vector.broadcast %269 : vector<1x256xf32> to vector<8x256xf32>
    %271 = arith.mulf %268, %270 : vector<8x256xf32>
    %c240_i32_95 = arith.constant 240 : i32
    %272 = tpu.dynamic_rotate %245 by %c240_i32_95 dim 1 : vector<8x256xf32>, i32 -> vector<8x256xf32>
    %273 = vector.extract_strided_slice %0 {offsets = [7, 0], sizes = [1, 256], strides = [1, 1]} : vector<9x256xf32> to vector<1x256xf32>
    %274 = vector.broadcast %273 : vector<1x256xf32> to vector<8x256xf32>
    %275 = arith.mulf %272, %274 : vector<8x256xf32>
    %c239_i32_96 = arith.constant 239 : i32
    %276 = tpu.dynamic_rotate %245 by %c239_i32_96 dim 1 : vector<8x256xf32>, i32 -> vector<8x256xf32>
    %277 = vector.extract_strided_slice %0 {offsets = [8, 0], sizes = [1, 256], strides = [1, 1]} : vector<9x256xf32> to vector<1x256xf32>
    %278 = vector.broadcast %277 : vector<1x256xf32> to vector<8x256xf32>
    %279 = arith.mulf %276, %278 : vector<8x256xf32>
    %280 = tpu.concatenate %251, %255, %259, %263, %245, %267, %271, %275, %279 in 0 : vector<8x256xf32>, vector<8x256xf32>, vector<8x256xf32>, vector<8x256xf32>, vector<8x256xf32>, vector<8x256xf32>, vector<8x256xf32>, vector<8x256xf32>, vector<8x256xf32> -> vector<72x256xf32>
    %281 = arith.truncf %280 : vector<72x256xf32> to vector<72x256xbf16>
    %c0_97 = arith.constant 0 : index
    %c0_98 = arith.constant 0 : index
    %282 = vector.load %arg15[%c0_97, %c0_98] : memref<8x72xbf16, #tpu.memory_space<vmem>>, vector<8x72xbf16>
    %cst_99 = arith.constant dense<0.000000e+00> : vector<8x256xf32>
    %283 = tpu.matmul %282, %281, %cst_99 {dimension_numbers = #tpu.dot_dimension_numbers<[1], [0], [0], [1], [0, 0, 1, 1], [], []>} : vector<8x72xbf16>, vector<72x256xbf16>, vector<8x256xf32> -> vector<8x256xf32>
    %cst_100 = arith.constant dense<0.000000e+00> : vector<8xf32>
    %284 = vector.multi_reduction <add>, %283, %cst_100 [1] : vector<8x256xf32> to vector<8xf32>
    %285 = vector.shape_cast %284 : vector<8xf32> to vector<8x1xf32>
    %cst_101 = arith.constant 2.560000e+02 : f32
    %286 = vector.broadcast %cst_101 : f32 to vector<8x1xf32>
    %287 = arith.divf %285, %286 : vector<8x1xf32>
    %cst_102 = arith.constant dense<0.000000e+00> : vector<1xf32>
    %288 = vector.multi_reduction <add>, %287, %cst_102 [0] : vector<8x1xf32> to vector<1xf32>
    %289 = vector.shape_cast %288 : vector<1xf32> to vector<1x1xf32>
    %cst_103 = arith.constant 8.000000e+00 : f32
    %290 = vector.broadcast %cst_103 : f32 to vector<1x1xf32>
    %291 = arith.divf %289, %290 : vector<1x1xf32>
    %292 = vector.broadcast %291 : vector<1x1xf32> to vector<8x256xf32>
    %293 = arith.subf %283, %292 : vector<8x256xf32>
    %294 = arith.mulf %293, %293 : vector<8x256xf32>
    %cst_104 = arith.constant dense<0.000000e+00> : vector<8xf32>
    %295 = vector.multi_reduction <add>, %294, %cst_104 [1] : vector<8x256xf32> to vector<8xf32>
    %296 = vector.shape_cast %295 : vector<8xf32> to vector<8x1xf32>
    %cst_105 = arith.constant 2.560000e+02 : f32
    %297 = vector.broadcast %cst_105 : f32 to vector<8x1xf32>
    %298 = arith.divf %296, %297 : vector<8x1xf32>
    %cst_106 = arith.constant dense<0.000000e+00> : vector<1xf32>
    %299 = vector.multi_reduction <add>, %298, %cst_106 [0] : vector<8x1xf32> to vector<1xf32>
    %300 = vector.shape_cast %299 : vector<1xf32> to vector<1x1xf32>
    %cst_107 = arith.constant 8.000000e+00 : f32
    %301 = vector.broadcast %cst_107 : f32 to vector<1x1xf32>
    %302 = arith.divf %300, %301 : vector<1x1xf32>
    %cst_108 = arith.constant 9.99999974E-6 : f32
    %303 = vector.broadcast %cst_108 : f32 to vector<1x1xf32>
    %304 = arith.addf %302, %303 : vector<1x1xf32>
    %305 = math.rsqrt %304 : vector<1x1xf32>
    %306 = vector.broadcast %305 : vector<1x1xf32> to vector<8x256xf32>
    %307 = arith.mulf %293, %306 : vector<8x256xf32>
    %308 = vector.broadcast %246 : vector<8x1xf32> to vector<8x256xf32>
    %309 = arith.mulf %307, %308 : vector<8x256xf32>
    %310 = vector.broadcast %247 : vector<8x1xf32> to vector<8x256xf32>
    %311 = arith.addf %309, %310 : vector<8x256xf32>
    %c0_109 = arith.constant 0 : index
    %c0_110 = arith.constant 0 : index
    %c0_111 = arith.constant 0 : index
    %312 = vector.load %arg3[%c0_109, %c0_110, %c0_111] : memref<1x1x128xf32, #tpu.memory_space<vmem>>, vector<1x1x128xf32>
    %313 = vector.shape_cast %312 : vector<1x1x128xf32> to vector<1x128xf32>
    %314 = arith.negf %313 : vector<1x128xf32>
    %315 = math.exp %314 : vector<1x128xf32>
    %cst_112 = arith.constant 1.000000e+00 : f32
    %316 = vector.broadcast %cst_112 : f32 to vector<1x128xf32>
    %317 = arith.addf %316, %315 : vector<1x128xf32>
    %318 = arith.divf %316, %317 : vector<1x128xf32>
    %319 = arith.mulf %313, %318 : vector<1x128xf32>
    %c0_113 = arith.constant 0 : index
    %c0_114 = arith.constant 0 : index
    %320 = vector.load %arg18[%c0_113, %c0_114] : memref<8x128xf32, #tpu.memory_space<vmem>>, vector<8x128xf32>
    %321 = vector.broadcast %319 : vector<1x128xf32> to vector<8x128xf32>
    %322 = arith.mulf %320, %321 : vector<8x128xf32>
    %cst_115 = arith.constant dense<0.000000e+00> : vector<8xf32>
    %323 = vector.multi_reduction <add>, %322, %cst_115 [1] : vector<8x128xf32> to vector<8xf32>
    %324 = vector.shape_cast %323 : vector<8xf32> to vector<8x1xf32>
    %325 = vector.broadcast %324 : vector<8x1xf32> to vector<8x256xf32>
    %326 = arith.addf %311, %325 : vector<8x256xf32>
    %c0_116 = arith.constant 0 : index
    %c0_117 = arith.constant 0 : index
    %327 = vector.load %arg19[%c0_116, %c0_117] : memref<8x1xf32, #tpu.memory_space<vmem>>, vector<8x1xf32>
    %328 = vector.broadcast %327 : vector<8x1xf32> to vector<8x256xf32>
    %329 = arith.addf %326, %328 : vector<8x256xf32>
    %c0_118 = arith.constant 0 : index
    %c0_119 = arith.constant 0 : index
    %c0_120 = arith.constant 0 : index
    %330 = vector.load %arg20[%c0_118, %c0_119, %c0_120] : memref<1x8x256xf32, #tpu.memory_space<vmem>>, vector<1x8x256xf32>
    %331 = vector.shape_cast %330 : vector<1x8x256xf32> to vector<8x256xf32>
    %332 = vector.shape_cast %329 : vector<8x256xf32> to vector<1x8x256xf32>
    tpu.vector_store %arg20[%c0_118, %c0_119, %c0_120], %332 {strides = array<i32>} : memref<1x8x256xf32, #tpu.memory_space<vmem>>, vector<1x8x256xf32>,
    return
  }
  func.func @transform_0(%arg0: i32) -> (i32, i32, i32) {
    %c0_i32 = arith.constant 0 : i32
    %c0_i32_0 = arith.constant 0 : i32
    %c0_i32_1 = arith.constant 0 : i32
    return %arg0, %c0_i32, %c0_i32_0 : i32, i32, i32
  }
  func.func @transform_1(%arg0: i32) -> (i32, i32, i32) {
    %c0_i32 = arith.constant 0 : i32
    %c0_i32_0 = arith.constant 0 : i32
    %c0_i32_1 = arith.constant 0 : i32
    return %arg0, %c0_i32, %c0_i32_0 : i32, i32, i32
  }
  func.func @transform_2(%arg0: i32) -> (i32, i32, i32) {
    %c0_i32 = arith.constant 0 : i32
    %c0_i32_0 = arith.constant 0 : i32
    %c0_i32_1 = arith.constant 0 : i32
    return %arg0, %c0_i32, %c0_i32_0 : i32, i32, i32
  }
  func.func @transform_3(%arg0: i32) -> (i32, i32) {
    %c0_i32 = arith.constant 0 : i32
    %c0_i32_0 = arith.constant 0 : i32
    %c0_i32_1 = arith.constant 0 : i32
    return %c0_i32, %c0_i32_0 : i32, i32
  }
  func.func @transform_4(%arg0: i32) -> (i32, i32) {
    %c0_i32 = arith.constant 0 : i32
    %c0_i32_0 = arith.constant 0 : i32
    %c0_i32_1 = arith.constant 0 : i32
    return %c0_i32, %c0_i32_0 : i32, i32
  }
  func.func @transform_5(%arg0: i32) -> (i32, i32) {
    %c0_i32 = arith.constant 0 : i32
    %c0_i32_0 = arith.constant 0 : i32
    %c0_i32_1 = arith.constant 0 : i32
    return %c0_i32, %c0_i32_0 : i32, i32
  }
  func.func @transform_6(%arg0: i32) -> (i32, i32) {
    %c0_i32 = arith.constant 0 : i32
    %c0_i32_0 = arith.constant 0 : i32
    %c0_i32_1 = arith.constant 0 : i32
    return %c0_i32, %c0_i32_0 : i32, i32
  }
  func.func @transform_7(%arg0: i32) -> (i32, i32) {
    %c0_i32 = arith.constant 0 : i32
    %c0_i32_0 = arith.constant 0 : i32
    %c0_i32_1 = arith.constant 0 : i32
    return %c0_i32, %c0_i32_0 : i32, i32
  }
  func.func @transform_8(%arg0: i32) -> (i32, i32) {
    %c0_i32 = arith.constant 0 : i32
    %c0_i32_0 = arith.constant 0 : i32
    %c0_i32_1 = arith.constant 0 : i32
    return %c0_i32, %c0_i32_0 : i32, i32
  }
  func.func @transform_9(%arg0: i32) -> (i32, i32) {
    %c0_i32 = arith.constant 0 : i32
    %c0_i32_0 = arith.constant 0 : i32
    %c0_i32_1 = arith.constant 0 : i32
    return %c0_i32, %c0_i32_0 : i32, i32
  }
  func.func @transform_10(%arg0: i32) -> (i32, i32) {
    %c0_i32 = arith.constant 0 : i32
    %c0_i32_0 = arith.constant 0 : i32
    %c0_i32_1 = arith.constant 0 : i32
    return %c0_i32, %c0_i32_0 : i32, i32
  }
  func.func @transform_11(%arg0: i32) -> (i32, i32) {
    %c0_i32 = arith.constant 0 : i32
    %c0_i32_0 = arith.constant 0 : i32
    %c0_i32_1 = arith.constant 0 : i32
    return %c0_i32, %c0_i32_0 : i32, i32
  }
  func.func @transform_12(%arg0: i32) -> (i32, i32) {
    %c0_i32 = arith.constant 0 : i32
    %c0_i32_0 = arith.constant 0 : i32
    %c0_i32_1 = arith.constant 0 : i32
    return %c0_i32, %c0_i32_0 : i32, i32
  }
  func.func @transform_13(%arg0: i32) -> (i32, i32) {
    %c0_i32 = arith.constant 0 : i32
    %c0_i32_0 = arith.constant 0 : i32
    %c0_i32_1 = arith.constant 0 : i32
    return %c0_i32, %c0_i32_0 : i32, i32
  }
  func.func @transform_14(%arg0: i32) -> (i32, i32) {
    %c0_i32 = arith.constant 0 : i32
    %c0_i32_0 = arith.constant 0 : i32
    %c0_i32_1 = arith.constant 0 : i32
    return %c0_i32, %c0_i32_0 : i32, i32
  }
  func.func @transform_15(%arg0: i32) -> (i32, i32) {
    %c0_i32 = arith.constant 0 : i32
    %c0_i32_0 = arith.constant 0 : i32
    %c0_i32_1 = arith.constant 0 : i32
    return %c0_i32, %c0_i32_0 : i32, i32
  }
  func.func @transform_16(%arg0: i32) -> (i32, i32) {
    %c0_i32 = arith.constant 0 : i32
    %c0_i32_0 = arith.constant 0 : i32
    %c0_i32_1 = arith.constant 0 : i32
    return %c0_i32, %c0_i32_0 : i32, i32
  }
  func.func @transform_17(%arg0: i32) -> (i32, i32) {
    %c0_i32 = arith.constant 0 : i32
    %c0_i32_0 = arith.constant 0 : i32
    %c0_i32_1 = arith.constant 0 : i32
    return %c0_i32, %c0_i32_0 : i32, i32
  }
  func.func @transform_18(%arg0: i32) -> (i32, i32) {
    %c0_i32 = arith.constant 0 : i32
    %c0_i32_0 = arith.constant 0 : i32
    %c0_i32_1 = arith.constant 0 : i32
    return %c0_i32, %c0_i32_0 : i32, i32
  }
  func.func @transform_19(%arg0: i32) -> (i32, i32, i32) {
    %c0_i32 = arith.constant 0 : i32
    %c0_i32_0 = arith.constant 0 : i32
    %c0_i32_1 = arith.constant 0 : i32
    return %arg0, %c0_i32, %c0_i32_0 : i32, i32, i32
  }
}

</mosaic_0001>

<llo_original>
// kernel: up_forward.1
$region0: #{up_forward.1}
  #allocation0 [shape = 'u32[]', space=smem, size = 0x4, offset = 0x4, fixed_abs, tag = 'smem constant byte address 0x4 - core index']
  #allocation1 [shape = 'u32[72,128]{1,0:T(1,128)}', space=vmem, size = 0x9000, scoped, tag = 'internal scratch']
  %s0 = inlined_call_operand.vmem [shape: f32[2,8,64], index: 0, kind: input, shape index: {}]
  %s1 = inlined_call_operand.vmem [shape: f32[2,8,256], index: 1, kind: input, shape index: {}]
  %s2 = inlined_call_operand.vmem [shape: f32[2,1,128], index: 2, kind: input, shape index: {}]
  %s3 = inlined_call_operand.vmem [shape: f32[64,256], index: 3, kind: input, shape index: {}]
  %s4 = inlined_call_operand.vmem [shape: f32[9,256], index: 4, kind: input, shape index: {}]
  %s5 = inlined_call_operand.vmem [shape: bf16[16,144], index: 5, kind: input, shape index: {}]
  %s6 = inlined_call_operand.vmem [shape: f32[16,1], index: 6, kind: input, shape index: {}]
  %s7 = inlined_call_operand.vmem [shape: f32[16,1], index: 7, kind: input, shape index: {}]
  %s8 = inlined_call_operand.vmem [shape: bf16[16,144], index: 8, kind: input, shape index: {}]
  %s9 = inlined_call_operand.vmem [shape: f32[16,1], index: 9, kind: input, shape index: {}]
  %s10 = inlined_call_operand.vmem [shape: f32[16,1], index: 10, kind: input, shape index: {}]
  %s11 = inlined_call_operand.vmem [shape: bf16[8,144], index: 11, kind: input, shape index: {}]
  %s12 = inlined_call_operand.vmem [shape: f32[8,1], index: 12, kind: input, shape index: {}]
  %s13 = inlined_call_operand.vmem [shape: f32[8,1], index: 13, kind: input, shape index: {}]
  %s14 = inlined_call_operand.vmem [shape: bf16[8,72], index: 14, kind: input, shape index: {}]
  %s15 = inlined_call_operand.vmem [shape: f32[8,1], index: 15, kind: input, shape index: {}]
  %s16 = inlined_call_operand.vmem [shape: f32[8,1], index: 16, kind: input, shape index: {}]
  %s17 = inlined_call_operand.vmem [shape: f32[8,128], index: 17, kind: input, shape index: {}]
  %s18 = inlined_call_operand.vmem [shape: f32[8,1], index: 18, kind: input, shape index: {}]
  %s19 = inlined_call_operand.vmem [shape: f32[2,8,256], index: 19, kind: output, shape index: {}]
  %s20 = sld [smem:[#allocation0]]
  $region109: #{up_forward.1} parent=0
    _
  %s22 = ssub.s32 1, %s20
  %s23 = scalar_select 0, %s22, %s20
  loop: start=0, step=1, limit=4
  $region2: #{up_forward.1} parent=0 // loop_pre_header
    _
  $region3: #{up_forward.1} parent=0 // loop_header
    %s25 = sphi 0, %s29
    %p26 = scmp.ge.s32.totalorder %s25, 4
    %s35 = sphi 0, %s37
    %s38 = sphi 0, %s35
    %s39 = sphi 0, %s38
    %s55 = sphi 0, %s39
    %s61 = sphi 0, %s63
    %s64 = sphi 0, %s61
    %s65 = sphi 0, %s64
    %s81 = sphi 0, %s65
    %s87 = sphi 0, %s89
    %s90 = sphi 0, %s87
    %s91 = sphi 0, %s90
    %s107 = sphi 0, %s91
    %s111 = sphi 0, %s111
    %s113 = sphi 0, %s111
    %s114 = sphi 0, %s113
    %s128 = sphi 0, %s114
    %s132 = sphi 0, %s132
    %s134 = sphi 0, %s132
    %s135 = sphi 0, %s134
    %s149 = sphi 0, %s135
    %s153 = sphi 0, %s153
    %s155 = sphi 0, %s153
    %s156 = sphi 0, %s155
    %s170 = sphi 0, %s156
    %s174 = sphi 0, %s174
    %s176 = sphi 0, %s174
    %s177 = sphi 0, %s176
    %s191 = sphi 0, %s177
    %s195 = sphi 0, %s195
    %s197 = sphi 0, %s195
    %s198 = sphi 0, %s197
    %s212 = sphi 0, %s198
    %s216 = sphi 0, %s216
    %s218 = sphi 0, %s216
    %s219 = sphi 0, %s218
    %s233 = sphi 0, %s219
    %s237 = sphi 0, %s237
    %s239 = sphi 0, %s237
    %s240 = sphi 0, %s239
    %s254 = sphi 0, %s240
    %s258 = sphi 0, %s258
    %s260 = sphi 0, %s258
    %s261 = sphi 0, %s260
    %s275 = sphi 0, %s261
    %s279 = sphi 0, %s279
    %s281 = sphi 0, %s279
    %s282 = sphi 0, %s281
    %s296 = sphi 0, %s282
    %s300 = sphi 0, %s300
    %s302 = sphi 0, %s300
    %s303 = sphi 0, %s302
    %s317 = sphi 0, %s303
    %s321 = sphi 0, %s321
    %s323 = sphi 0, %s321
    %s324 = sphi 0, %s323
    %s338 = sphi 0, %s324
    %s342 = sphi 0, %s342
    %s344 = sphi 0, %s342
    %s345 = sphi 0, %s344
    %s359 = sphi 0, %s345
    %s363 = sphi 0, %s363
    %s365 = sphi 0, %s363
    %s366 = sphi 0, %s365
    %s380 = sphi 0, %s366
    %s384 = sphi 0, %s384
    %s386 = sphi 0, %s384
    %s387 = sphi 0, %s386
    %s401 = sphi 0, %s387
    %s405 = sphi 0, %s405
    %s407 = sphi 0, %s405
    %s408 = sphi 0, %s407
    %s422 = sphi 0, %s408
    %s426 = sphi 0, %s426
    %s428 = sphi 0, %s426
    %s429 = sphi 0, %s428
    %s443 = sphi 0, %s429
    %s449 = sphi 0, %s451
    %s452 = sphi 0, %s449
    %s453 = sphi 0, %s452
    %s469 = sphi 0, %s453
  $region4: #{up_forward.1} parent=0 // loop_header_branch
    %28 = sbr.rel (%p26) target = $region8
  $region5: #{up_forward.1} parent=0 // loop_body
    %s30 = ssub.s32 %s25, 1
    %s31 = ssub.s32 %s25, 2
    %s32 = sadd.s32 %s25, 1
    %s33 = ssub.s32 %s25, %s32
    %p34 = scmp.eq.s32.totalorder %s33, 0
    %s36 = sadd.s32 %s35, 1
    %s37 = scalar_select %p34, %s35, %s36
    %p40 = pneg %p34
    %p41 = scmp.eq.s32.totalorder %s25, 1
    %p42 = por %p40, %p41
    %p43 = scmp.ne.s32.totalorder %s35, %s38
    %p44 = scmp.eq.s32.totalorder %s25, 0
    %p45 = por %p43, %p44
    %p46 = scmp.ne.s32.totalorder %s35, %s38
    %p47 = scmp.eq.s32.totalorder %s30, 1
    %p48 = por %p46, %p47
    %p49 = scmp.ne.s32.totalorder %s38, %s39
    %p50 = scmp.eq.s32.totalorder %s30, 0
    %p51 = por %p49, %p50
    %p52 = scmp.ne.s32.totalorder %s38, %s39
    %p53 = scmp.eq.s32.totalorder %s31, 1
    %p54 = por %p52, %p53
    %p56 = scmp.ne.s32.totalorder %s39, %s55
    %p57 = scmp.eq.s32.totalorder %s31, 0
    %p58 = por %p56, %p57
    %s59 = ssub.s32 %s25, %s32
    %p60 = scmp.eq.s32.totalorder %s59, 0
    %s62 = sadd.s32 %s61, 1
    %s63 = scalar_select %p60, %s61, %s62
    %p66 = pneg %p60
    %p67 = scmp.eq.s32.totalorder %s25, 1
    %p68 = por %p66, %p67
    %p69 = scmp.ne.s32.totalorder %s61, %s64
    %p70 = scmp.eq.s32.totalorder %s25, 0
    %p71 = por %p69, %p70
    %p72 = scmp.ne.s32.totalorder %s61, %s64
    %p73 = scmp.eq.s32.totalorder %s30, 1
    %p74 = por %p72, %p73
    %p75 = scmp.ne.s32.totalorder %s64, %s65
    %p76 = scmp.eq.s32.totalorder %s30, 0
    %p77 = por %p75, %p76
    %p78 = scmp.ne.s32.totalorder %s64, %s65
    %p79 = scmp.eq.s32.totalorder %s31, 1
    %p80 = por %p78, %p79
    %p82 = scmp.ne.s32.totalorder %s65, %s81
    %p83 = scmp.eq.s32.totalorder %s31, 0
    %p84 = por %p82, %p83
    %s85 = ssub.s32 %s25, %s32
    %p86 = scmp.eq.s32.totalorder %s85, 0
    %s88 = sadd.s32 %s87, 1
    %s89 = scalar_select %p86, %s87, %s88
    %p92 = pneg %p86
    %p93 = scmp.eq.s32.totalorder %s25, 1
    %p94 = por %p92, %p93
    %p95 = scmp.ne.s32.totalorder %s87, %s90
    %p96 = scmp.eq.s32.totalorder %s25, 0
    %p97 = por %p95, %p96
    %p98 = scmp.ne.s32.totalorder %s87, %s90
    %p99 = scmp.eq.s32.totalorder %s30, 1
    %p100 = por %p98, %p99
    %p101 = scmp.ne.s32.totalorder %s90, %s91
    %p102 = scmp.eq.s32.totalorder %s30, 0
    %p103 = por %p101, %p102
    %p104 = scmp.ne.s32.totalorder %s90, %s91
    %p105 = scmp.eq.s32.totalorder %s31, 1
    %p106 = por %p104, %p105
    %p108 = scmp.ne.s32.totalorder %s91, %s107
    %p109 = scmp.eq.s32.totalorder %s31, 0
    %p110 = por %p108, %p109
    %s112 = sadd.s32 %s111, 1
    %p115 = scmp.eq.s32.totalorder %s25, 1
    %p116 = scmp.ne.s32.totalorder %s111, %s113
    %p117 = scmp.eq.s32.totalorder %s25, 0
    %p118 = por %p116, %p117
    %p119 = scmp.ne.s32.totalorder %s111, %s113
    %p120 = scmp.eq.s32.totalorder %s30, 1
    %p121 = por %p119, %p120
    %p122 = scmp.ne.s32.totalorder %s113, %s114
    %p123 = scmp.eq.s32.totalorder %s30, 0
    %p124 = por %p122, %p123
    %p125 = scmp.ne.s32.totalorder %s113, %s114
    %p126 = scmp.eq.s32.totalorder %s31, 1
    %p127 = por %p125, %p126
    %p129 = scmp.ne.s32.totalorder %s114, %s128
    %p130 = scmp.eq.s32.totalorder %s31, 0
    %p131 = por %p129, %p130
    %s133 = sadd.s32 %s132, 1
    %p136 = scmp.eq.s32.totalorder %s25, 1
    %p137 = scmp.ne.s32.totalorder %s132, %s134
    %p138 = scmp.eq.s32.totalorder %s25, 0
    %p139 = por %p137, %p138
    %p140 = scmp.ne.s32.totalorder %s132, %s134
    %p141 = scmp.eq.s32.totalorder %s30, 1
    %p142 = por %p140, %p141
    %p143 = scmp.ne.s32.totalorder %s134, %s135
    %p144 = scmp.eq.s32.totalorder %s30, 0
    %p145 = por %p143, %p144
    %p146 = scmp.ne.s32.totalorder %s134, %s135
    %p147 = scmp.eq.s32.totalorder %s31, 1
    %p148 = por %p146, %p147
    %p150 = scmp.ne.s32.totalorder %s135, %s149
    %p151 = scmp.eq.s32.totalorder %s31, 0
    %p152 = por %p150, %p151
    %s154 = sadd.s32 %s153, 1
    %p157 = scmp.eq.s32.totalorder %s25, 1
    %p158 = scmp.ne.s32.totalorder %s153, %s155
    %p159 = scmp.eq.s32.totalorder %s25, 0
    %p160 = por %p158, %p159
    %p161 = scmp.ne.s32.totalorder %s153, %s155
    %p162 = scmp.eq.s32.totalorder %s30, 1
    %p163 = por %p161, %p162
    %p164 = scmp.ne.s32.totalorder %s155, %s156
    %p165 = scmp.eq.s32.totalorder %s30, 0
    %p166 = por %p164, %p165
    %p167 = scmp.ne.s32.totalorder %s155, %s156
    %p168 = scmp.eq.s32.totalorder %s31, 1
    %p169 = por %p167, %p168
    %p171 = scmp.ne.s32.totalorder %s156, %s170
    %p172 = scmp.eq.s32.totalorder %s31, 0
    %p173 = por %p171, %p172
    %s175 = sadd.s32 %s174, 1
    %p178 = scmp.eq.s32.totalorder %s25, 1
    %p179 = scmp.ne.s32.totalorder %s174, %s176
    %p180 = scmp.eq.s32.totalorder %s25, 0
    %p181 = por %p179, %p180
    %p182 = scmp.ne.s32.totalorder %s174, %s176
    %p183 = scmp.eq.s32.totalorder %s30, 1
    %p184 = por %p182, %p183
    %p185 = scmp.ne.s32.totalorder %s176, %s177
    %p186 = scmp.eq.s32.totalorder %s30, 0
    %p187 = por %p185, %p186
    %p188 = scmp.ne.s32.totalorder %s176, %s177
    %p189 = scmp.eq.s32.totalorder %s31, 1
    %p190 = por %p188, %p189
    %p192 = scmp.ne.s32.totalorder %s177, %s191
    %p193 = scmp.eq.s32.totalorder %s31, 0
    %p194 = por %p192, %p193
    %s196 = sadd.s32 %s195, 1
    %p199 = scmp.eq.s32.totalorder %s25, 1
    %p200 = scmp.ne.s32.totalorder %s195, %s197
    %p201 = scmp.eq.s32.totalorder %s25, 0
    %p202 = por %p200, %p201
    %p203 = scmp.ne.s32.totalorder %s195, %s197
    %p204 = scmp.eq.s32.totalorder %s30, 1
    %p205 = por %p203, %p204
    %p206 = scmp.ne.s32.totalorder %s197, %s198
    %p207 = scmp.eq.s32.totalorder %s30, 0
    %p208 = por %p206, %p207
    %p209 = scmp.ne.s32.totalorder %s197, %s198
    %p210 = scmp.eq.s32.totalorder %s31, 1
    %p211 = por %p209, %p210
    %p213 = scmp.ne.s32.totalorder %s198, %s212
    %p214 = scmp.eq.s32.totalorder %s31, 0
    %p215 = por %p213, %p214
    %s217 = sadd.s32 %s216, 1
    %p220 = scmp.eq.s32.totalorder %s25, 1
    %p221 = scmp.ne.s32.totalorder %s216, %s218
    %p222 = scmp.eq.s32.totalorder %s25, 0
    %p223 = por %p221, %p222
    %p224 = scmp.ne.s32.totalorder %s216, %s218
    %p225 = scmp.eq.s32.totalorder %s30, 1
    %p226 = por %p224, %p225
    %p227 = scmp.ne.s32.totalorder %s218, %s219
    %p228 = scmp.eq.s32.totalorder %s30, 0
    %p229 = por %p227, %p228
    %p230 = scmp.ne.s32.totalorder %s218, %s219
    %p231 = scmp.eq.s32.totalorder %s31, 1
    %p232 = por %p230, %p231
    %p234 = scmp.ne.s32.totalorder %s219, %s233
    %p235 = scmp.eq.s32.totalorder %s31, 0
    %p236 = por %p234, %p235
    %s238 = sadd.s32 %s237, 1
    %p241 = scmp.eq.s32.totalorder %s25, 1
    %p242 = scmp.ne.s32.totalorder %s237, %s239
    %p243 = scmp.eq.s32.totalorder %s25, 0
    %p244 = por %p242, %p243
    %p245 = scmp.ne.s32.totalorder %s237, %s239
    %p246 = scmp.eq.s32.totalorder %s30, 1
    %p247 = por %p245, %p246
    %p248 = scmp.ne.s32.totalorder %s239, %s240
    %p249 = scmp.eq.s32.totalorder %s30, 0
    %p250 = por %p248, %p249
    %p251 = scmp.ne.s32.totalorder %s239, %s240
    %p252 = scmp.eq.s32.totalorder %s31, 1
    %p253 = por %p251, %p252
    %p255 = scmp.ne.s32.totalorder %s240, %s254
    %p256 = scmp.eq.s32.totalorder %s31, 0
    %p257 = por %p255, %p256
    %s259 = sadd.s32 %s258, 1
    %p262 = scmp.eq.s32.totalorder %s25, 1
    %p263 = scmp.ne.s32.totalorder %s258, %s260
    %p264 = scmp.eq.s32.totalorder %s25, 0
    %p265 = por %p263, %p264
    %p266 = scmp.ne.s32.totalorder %s258, %s260
    %p267 = scmp.eq.s32.totalorder %s30, 1
    %p268 = por %p266, %p267
    %p269 = scmp.ne.s32.totalorder %s260, %s261
    %p270 = scmp.eq.s32.totalorder %s30, 0
    %p271 = por %p269, %p270
    %p272 = scmp.ne.s32.totalorder %s260, %s261
    %p273 = scmp.eq.s32.totalorder %s31, 1
    %p274 = por %p272, %p273
    %p276 = scmp.ne.s32.totalorder %s261, %s275
    %p277 = scmp.eq.s32.totalorder %s31, 0
    %p278 = por %p276, %p277
    %s280 = sadd.s32 %s279, 1
    %p283 = scmp.eq.s32.totalorder %s25, 1
    %p284 = scmp.ne.s32.totalorder %s279, %s281
    %p285 = scmp.eq.s32.totalorder %s25, 0
    %p286 = por %p284, %p285
    %p287 = scmp.ne.s32.totalorder %s279, %s281
    %p288 = scmp.eq.s32.totalorder %s30, 1
    %p289 = por %p287, %p288
    %p290 = scmp.ne.s32.totalorder %s281, %s282
    %p291 = scmp.eq.s32.totalorder %s30, 0
    %p292 = por %p290, %p291
    %p293 = scmp.ne.s32.totalorder %s281, %s282
    %p294 = scmp.eq.s32.totalorder %s31, 1
    %p295 = por %p293, %p294
    %p297 = scmp.ne.s32.totalorder %s282, %s296
    %p298 = scmp.eq.s32.totalorder %s31, 0
    %p299 = por %p297, %p298
    %s301 = sadd.s32 %s300, 1
    %p304 = scmp.eq.s32.totalorder %s25, 1
    %p305 = scmp.ne.s32.totalorder %s300, %s302
    %p306 = scmp.eq.s32.totalorder %s25, 0
    %p307 = por %p305, %p306
    %p308 = scmp.ne.s32.totalorder %s300, %s302
    %p309 = scmp.eq.s32.totalorder %s30, 1
    %p310 = por %p308, %p309
    %p311 = scmp.ne.s32.totalorder %s302, %s303
    %p312 = scmp.eq.s32.totalorder %s30, 0
    %p313 = por %p311, %p312
    %p314 = scmp.ne.s32.totalorder %s302, %s303
    %p315 = scmp.eq.s32.totalorder %s31, 1
    %p316 = por %p314, %p315
    %p318 = scmp.ne.s32.totalorder %s303, %s317
    %p319 = scmp.eq.s32.totalorder %s31, 0
    %p320 = por %p318, %p319
    %s322 = sadd.s32 %s321, 1
    %p325 = scmp.eq.s32.totalorder %s25, 1
    %p326 = scmp.ne.s32.totalorder %s321, %s323
    %p327 = scmp.eq.s32.totalorder %s25, 0
    %p328 = por %p326, %p327
    %p329 = scmp.ne.s32.totalorder %s321, %s323
    %p330 = scmp.eq.s32.totalorder %s30, 1
    %p331 = por %p329, %p330
    %p332 = scmp.ne.s32.totalorder %s323, %s324
    %p333 = scmp.eq.s32.totalorder %s30, 0
    %p334 = por %p332, %p333
    %p335 = scmp.ne.s32.totalorder %s323, %s324
    %p336 = scmp.eq.s32.totalorder %s31, 1
    %p337 = por %p335, %p336
    %p339 = scmp.ne.s32.totalorder %s324, %s338
    %p340 = scmp.eq.s32.totalorder %s31, 0
    %p341 = por %p339, %p340
    %s343 = sadd.s32 %s342, 1
    %p346 = scmp.eq.s32.totalorder %s25, 1
    %p347 = scmp.ne.s32.totalorder %s342, %s344
    %p348 = scmp.eq.s32.totalorder %s25, 0
    %p349 = por %p347, %p348
    %p350 = scmp.ne.s32.totalorder %s342, %s344
    %p351 = scmp.eq.s32.totalorder %s30, 1
    %p352 = por %p350, %p351
    %p353 = scmp.ne.s32.totalorder %s344, %s345
    %p354 = scmp.eq.s32.totalorder %s30, 0
    %p355 = por %p353, %p354
    %p356 = scmp.ne.s32.totalorder %s344, %s345
    %p357 = scmp.eq.s32.totalorder %s31, 1
    %p358 = por %p356, %p357
    %p360 = scmp.ne.s32.totalorder %s345, %s359
    %p361 = scmp.eq.s32.totalorder %s31, 0
    %p362 = por %p360, %p361
    %s364 = sadd.s32 %s363, 1
    %p367 = scmp.eq.s32.totalorder %s25, 1
    %p368 = scmp.ne.s32.totalorder %s363, %s365
    %p369 = scmp.eq.s32.totalorder %s25, 0
    %p370 = por %p368, %p369
    %p371 = scmp.ne.s32.totalorder %s363, %s365
    %p372 = scmp.eq.s32.totalorder %s30, 1
    %p373 = por %p371, %p372
    %p374 = scmp.ne.s32.totalorder %s365, %s366
    %p375 = scmp.eq.s32.totalorder %s30, 0
    %p376 = por %p374, %p375
    %p377 = scmp.ne.s32.totalorder %s365, %s366
    %p378 = scmp.eq.s32.totalorder %s31, 1
    %p379 = por %p377, %p378
    %p381 = scmp.ne.s32.totalorder %s366, %s380
    %p382 = scmp.eq.s32.totalorder %s31, 0
    %p383 = por %p381, %p382
    %s385 = sadd.s32 %s384, 1
    %p388 = scmp.eq.s32.totalorder %s25, 1
    %p389 = scmp.ne.s32.totalorder %s384, %s386
    %p390 = scmp.eq.s32.totalorder %s25, 0
    %p391 = por %p389, %p390
    %p392 = scmp.ne.s32.totalorder %s384, %s386
    %p393 = scmp.eq.s32.totalorder %s30, 1
    %p394 = por %p392, %p393
    %p395 = scmp.ne.s32.totalorder %s386, %s387
    %p396 = scmp.eq.s32.totalorder %s30, 0
    %p397 = por %p395, %p396
    %p398 = scmp.ne.s32.totalorder %s386, %s387
    %p399 = scmp.eq.s32.totalorder %s31, 1
    %p400 = por %p398, %p399
    %p402 = scmp.ne.s32.totalorder %s387, %s401
    %p403 = scmp.eq.s32.totalorder %s31, 0
    %p404 = por %p402, %p403
    %s406 = sadd.s32 %s405, 1
    %p409 = scmp.eq.s32.totalorder %s25, 1
    %p410 = scmp.ne.s32.totalorder %s405, %s407
    %p411 = scmp.eq.s32.totalorder %s25, 0
    %p412 = por %p410, %p411
    %p413 = scmp.ne.s32.totalorder %s405, %s407
    %p414 = scmp.eq.s32.totalorder %s30, 1
    %p415 = por %p413, %p414
    %p416 = scmp.ne.s32.totalorder %s407, %s408
    %p417 = scmp.eq.s32.totalorder %s30, 0
    %p418 = por %p416, %p417
    %p419 = scmp.ne.s32.totalorder %s407, %s408
    %p420 = scmp.eq.s32.totalorder %s31, 1
    %p421 = por %p419, %p420
    %p423 = scmp.ne.s32.totalorder %s408, %s422
    %p424 = scmp.eq.s32.totalorder %s31, 0
    %p425 = por %p423, %p424
    %s427 = sadd.s32 %s426, 1
    %p430 = scmp.eq.s32.totalorder %s25, 1
    %p431 = scmp.ne.s32.totalorder %s426, %s428
    %p432 = scmp.eq.s32.totalorder %s25, 0
    %p433 = por %p431, %p432
    %p434 = scmp.ne.s32.totalorder %s426, %s428
    %p435 = scmp.eq.s32.totalorder %s30, 1
    %p436 = por %p434, %p435
    %p437 = scmp.ne.s32.totalorder %s428, %s429
    %p438 = scmp.eq.s32.totalorder %s30, 0
    %p439 = por %p437, %p438
    %p440 = scmp.ne.s32.totalorder %s428, %s429
    %p441 = scmp.eq.s32.totalorder %s31, 1
    %p442 = por %p440, %p441
    %p444 = scmp.ne.s32.totalorder %s429, %s443
    %p445 = scmp.eq.s32.totalorder %s31, 0
    %p446 = por %p444, %p445
    %s447 = ssub.s32 %s25, %s32
    %p448 = scmp.eq.s32.totalorder %s447, 0
    %s450 = sadd.s32 %s449, 1
    %s451 = scalar_select %p448, %s449, %s450
    %p454 = pneg %p448
    %p455 = scmp.eq.s32.totalorder %s25, 1
    %p456 = por %p454, %p455
    %p457 = scmp.ne.s32.totalorder %s449, %s452
    %p458 = scmp.eq.s32.totalorder %s25, 0
    %p459 = por %p457, %p458
    %p460 = scmp.ne.s32.totalorder %s449, %s452
    %p461 = scmp.eq.s32.totalorder %s30, 1
    %p462 = por %p460, %p461
    %p463 = scmp.ne.s32.totalorder %s452, %s453
    %p464 = scmp.eq.s32.totalorder %s30, 0
    %p465 = por %p463, %p464
    %p466 = scmp.ne.s32.totalorder %s452, %s453
    %p467 = scmp.eq.s32.totalorder %s31, 1
    %p468 = por %p466, %p467
    %p470 = scmp.ne.s32.totalorder %s453, %s469
    %p471 = scmp.eq.s32.totalorder %s31, 0
    %p472 = por %p470, %p471
    %p473 = scmp.le.s32.totalorder 1, %s25
    %p474 = scmp.lt.s32.totalorder %s25, 3
    %p475 = pnand %p473, %p474
    %p476 = pneg %p475
    // Predicated region
    $region9: #{up_forward.1} parent=5 // pred_check
      _
    $region10: #{up_forward.1} parent=5 // pred_check_branch
      %478 = sbr.rel (%p475) target = $region12
    $region11: #{up_forward.1} parent=5 // pred_region
      %s479 = ssub.s32 %s25, 1
      // Predicated region
      $region13: #{up_forward.1} parent=11 // pred_check
        %p480 = pneg %p124
      $region14: #{up_forward.1} parent=11 // pred_check_branch
        %482 = sbr.rel (%p480) target = $region16
      $region15: #{up_forward.1} parent=11 // pred_region
        _
      $region16: #{up_forward.1} parent=11 // pred_fallthru
        _
      // Predicated region
      $region17: #{up_forward.1} parent=11 // pred_check
        %p483 = pneg %p145
      $region18: #{up_forward.1} parent=11 // pred_check_branch
        %485 = sbr.rel (%p483) target = $region20
      $region19: #{up_forward.1} parent=11 // pred_region
        _
      $region20: #{up_forward.1} parent=11 // pred_fallthru
        _
      // Predicated region
      $region21: #{up_forward.1} parent=11 // pred_check
        %p486 = pneg %p166
      $region22: #{up_forward.1} parent=11 // pred_check_branch
        %488 = sbr.rel (%p486) target = $region24
      $region23: #{up_forward.1} parent=11 // pred_region
        _
      $region24: #{up_forward.1} parent=11 // pred_fallthru
        _
      // Predicated region
      $region25: #{up_forward.1} parent=11 // pred_check
        %p489 = pneg %p187
      $region26: #{up_forward.1} parent=11 // pred_check_branch
        %491 = sbr.rel (%p489) target = $region28
      $region27: #{up_forward.1} parent=11 // pred_region
        _
      $region28: #{up_forward.1} parent=11 // pred_fallthru
        _
      // Predicated region
      $region29: #{up_forward.1} parent=11 // pred_check
        %p492 = pneg %p208
      $region30: #{up_forward.1} parent=11 // pred_check_branch
        %494 = sbr.rel (%p492) target = $region32
      $region31: #{up_forward.1} parent=11 // pred_region
        _
      $region32: #{up_forward.1} parent=11 // pred_fallthru
        _
      // Predicated region
      $region33: #{up_forward.1} parent=11 // pred_check
        %p495 = pneg %p229
      $region34: #{up_forward.1} parent=11 // pred_check_branch
        %497 = sbr.rel (%p495) target = $region36
      $region35: #{up_forward.1} parent=11 // pred_region
        _
      $region36: #{up_forward.1} parent=11 // pred_fallthru
        _
      // Predicated region
      $region37: #{up_forward.1} parent=11 // pred_check
        %p498 = pneg %p250
      $region38: #{up_forward.1} parent=11 // pred_check_branch
        %500 = sbr.rel (%p498) target = $region40
      $region39: #{up_forward.1} parent=11 // pred_region
        _
      $region40: #{up_forward.1} parent=11 // pred_fallthru
        _
      // Predicated region
      $region41: #{up_forward.1} parent=11 // pred_check
        %p501 = pneg %p271
      $region42: #{up_forward.1} parent=11 // pred_check_branch
        %503 = sbr.rel (%p501) target = $region44
      $region43: #{up_forward.1} parent=11 // pred_region
        _
      $region44: #{up_forward.1} parent=11 // pred_fallthru
        _
      // Predicated region
      $region45: #{up_forward.1} parent=11 // pred_check
        %p504 = pneg %p292
      $region46: #{up_forward.1} parent=11 // pred_check_branch
        %506 = sbr.rel (%p504) target = $region48
      $region47: #{up_forward.1} parent=11 // pred_region
        _
      $region48: #{up_forward.1} parent=11 // pred_fallthru
        _
      // Predicated region
      $region49: #{up_forward.1} parent=11 // pred_check
        %p507 = pneg %p313
      $region50: #{up_forward.1} parent=11 // pred_check_branch
        %509 = sbr.rel (%p507) target = $region52
      $region51: #{up_forward.1} parent=11 // pred_region
        _
      $region52: #{up_forward.1} parent=11 // pred_fallthru
        _
      // Predicated region
      $region53: #{up_forward.1} parent=11 // pred_check
        %p510 = pneg %p334
      $region54: #{up_forward.1} parent=11 // pred_check_branch
        %512 = sbr.rel (%p510) target = $region56
      $region55: #{up_forward.1} parent=11 // pred_region
        _
      $region56: #{up_forward.1} parent=11 // pred_fallthru
        _
      // Predicated region
      $region57: #{up_forward.1} parent=11 // pred_check
        %p513 = pneg %p355
      $region58: #{up_forward.1} parent=11 // pred_check_branch
        %515 = sbr.rel (%p513) target = $region60
      $region59: #{up_forward.1} parent=11 // pred_region
        _
      $region60: #{up_forward.1} parent=11 // pred_fallthru
        _
      // Predicated region
      $region61: #{up_forward.1} parent=11 // pred_check
        %p516 = pneg %p376
      $region62: #{up_forward.1} parent=11 // pred_check_branch
        %518 = sbr.rel (%p516) target = $region64
      $region63: #{up_forward.1} parent=11 // pred_region
        _
      $region64: #{up_forward.1} parent=11 // pred_fallthru
        _
      // Predicated region
      $region65: #{up_forward.1} parent=11 // pred_check
        %p519 = pneg %p397
      $region66: #{up_forward.1} parent=11 // pred_check_branch
        %521 = sbr.rel (%p519) target = $region68
      $region67: #{up_forward.1} parent=11 // pred_region
        _
      $region68: #{up_forward.1} parent=11 // pred_fallthru
        _
      // Predicated region
      $region69: #{up_forward.1} parent=11 // pred_check
        %p522 = pneg %p418
      $region70: #{up_forward.1} parent=11 // pred_check_branch
        %524 = sbr.rel (%p522) target = $region72
      $region71: #{up_forward.1} parent=11 // pred_region
        _
      $region72: #{up_forward.1} parent=11 // pred_fallthru
        _
      // Predicated region
      $region73: #{up_forward.1} parent=11 // pred_check
        %p525 = pneg %p439
      $region74: #{up_forward.1} parent=11 // pred_check_branch
        %527 = sbr.rel (%p525) target = $region76
      $region75: #{up_forward.1} parent=11 // pred_region
        _
      $region76: #{up_forward.1} parent=11 // pred_fallthru
        _
    $region12: #{up_forward.1} parent=5 // pred_fallthru
      _
    %p528 = scmp.lt.s32.totalorder %s25, 2
    // Predicated region
    $region77: #{up_forward.1} parent=5 // pred_check
      %p529 = pneg %p528
    $region78: #{up_forward.1} parent=5 // pred_check_branch
      %531 = sbr.rel (%p529) target = $region80
    $region79: #{up_forward.1} parent=5 // pred_region
      // Predicated region
      $region81: #{up_forward.1} parent=79 // pred_check
        %p532 = pneg %p45
      $region82: #{up_forward.1} parent=79 // pred_check_branch
        %534 = sbr.rel (%p532) target = $region84
      $region83: #{up_forward.1} parent=79 // pred_region
        %p535 = scmp.lt.s32.totalorder %s25, 1
        %s536 = scalar_select %p535, %s25, 1
        %s537 = smul.addr %s536, 8
        %s538 = scalar_lea.vmem %s0, %s537
      $region84: #{up_forward.1} parent=79 // pred_fallthru
        _
      // Predicated region
      $region85: #{up_forward.1} parent=79 // pred_check
        %p539 = pneg %p71
      $region86: #{up_forward.1} parent=79 // pred_check_branch
        %541 = sbr.rel (%p539) target = $region88
      $region87: #{up_forward.1} parent=79 // pred_region
        %p542 = scmp.lt.s32.totalorder %s25, 1
        %s543 = scalar_select %p542, %s25, 1
        %s544 = smul.addr %s543, 2
        %s545 = smul.addr %s544, 8
        %s546 = scalar_lea.vmem %s1, %s545
      $region88: #{up_forward.1} parent=79 // pred_fallthru
        _
      // Predicated region
      $region89: #{up_forward.1} parent=79 // pred_check
        %p547 = pneg %p97
      $region90: #{up_forward.1} parent=79 // pred_check_branch
        %549 = sbr.rel (%p547) target = $region92
      $region91: #{up_forward.1} parent=79 // pred_region
        %p550 = scmp.lt.s32.totalorder %s25, 1
        %s551 = scalar_select %p550, %s25, 1
        %s552 = scalar_lea.vmem %s2, %s551
      $region92: #{up_forward.1} parent=79 // pred_fallthru
        _
    $region80: #{up_forward.1} parent=5 // pred_fallthru
      _
    %p553 = scmp.le.s32.totalorder 1, %s25
    %p554 = scmp.lt.s32.totalorder %s25, 3
    %p555 = pnand %p553, %p554
    %p556 = pneg %p555
    // Predicated region
    $region93: #{up_forward.1} parent=5 // pred_check
      _
    $region94: #{up_forward.1} parent=5 // pred_check_branch
      %558 = sbr.rel (%p555) target = $region96
    $region95: #{up_forward.1} parent=5 // pred_region
      %s559 = ssub.s32 %s25, 1
      %p560 = scmp.lt.s32.totalorder %s30, 1
      %s561 = scalar_select %p560, %s30, 1
      %s562 = smul.addr %s561, 8
      %s563 = scalar_lea.vmem %s0, %s562
      %p564 = pneg %p51
      %p565 = pneg %p48
      %p566 = scmp.lt.s32.totalorder %s30, 1
      %s567 = scalar_select %p566, %s30, 1
      %s568 = smul.addr %s567, 2
      %s569 = smul.addr %s568, 8
      %s570 = scalar_lea.vmem %s1, %s569
      %p571 = pneg %p77
      %p572 = pneg %p74
      %p573 = scmp.lt.s32.totalorder %s30, 1
      %s574 = scalar_select %p573, %s30, 1
      %s575 = scalar_lea.vmem %s2, %s574
      %p576 = pneg %p103
      %p577 = pneg %p100
      %p578 = pneg %p124
      %p579 = pneg %p121
      %p580 = pneg %p145
      %p581 = pneg %p142
      %p582 = pneg %p166
      %p583 = pneg %p163
      %p584 = pneg %p187
      %p585 = pneg %p184
      %p586 = pneg %p208
      %p587 = pneg %p205
      %p588 = pneg %p229
      %p589 = pneg %p226
      %p590 = pneg %p250
      %p591 = pneg %p247
      %p592 = pneg %p271
      %p593 = pneg %p268
      %p594 = pneg %p292
      %p595 = pneg %p289
      %p596 = pneg %p313
      %p597 = pneg %p310
      %p598 = pneg %p334
      %p599 = pneg %p331
      %p600 = pneg %p355
      %p601 = pneg %p352
      %p602 = pneg %p376
      %p603 = pneg %p373
      %p604 = pneg %p397
      %p605 = pneg %p394
      %p606 = pneg %p418
      %p607 = pneg %p415
      %p608 = pneg %p439
      %p609 = pneg %p436
      %p610 = pneg %p465
      %p611 = pneg %p462
      %p612 = scmp.lt.s32.totalorder %s30, 1
      %s613 = scalar_select %p612, %s30, 1
      %s614 = smul.addr %s613, 2
      %s615 = smul.addr %s614, 8
      %s616 = scalar_lea.vmem %s19, %s615
      %p617 = scmp.lt.s32.totalorder %s30, 1
      %s618 = scalar_select %p617, %s30, 1
      %s619 = smul.addr %s618, 8
      %s620 = scalar_lea.vmem %s0, %s619
      %p621 = scmp.lt.s32.totalorder %s30, 1
      %s622 = scalar_select %p621, %s30, 1
      %s623 = smul.addr %s622, 2
      %s624 = smul.addr %s623, 8
      %s625 = scalar_lea.vmem %s1, %s624
      %p626 = scmp.lt.s32.totalorder %s30, 1
      %s627 = scalar_select %p626, %s30, 1
      %s628 = scalar_lea.vmem %s2, %s627
      %p629 = scmp.lt.s32.totalorder %s30, 1
      %s630 = scalar_select %p629, %s30, 1
      %s631 = smul.addr %s630, 2
      %s632 = smul.addr %s631, 8
      %s633 = scalar_lea.vmem %s19, %s632
      %v635 = vld [vmem:[%s4] sm:$0xff]
      %v636 = vld [vmem:[%s4 + $0x8] sm:$0xff]
      %v637 = vld [vmem:[%s4 + $0x10] sm:$0x1]
      %v638 = vld [vmem:[%s4 + $0x18] sm:$0x1]
      %v639 = vld [vmem:[%s620] sm:$0xff]
      %v640 = vld [vmem:[%s3] sm:$0xff]
      %v641 = vld [vmem:[%s3 + $0x8] sm:$0xff]
      %v642 = vld [vmem:[%s3 + $0x10] sm:$0xff]
      %v643 = vld [vmem:[%s3 + $0x18] sm:$0xff]
      %v644 = vld [vmem:[%s3 + $0x20] sm:$0xff]
      %v645 = vld [vmem:[%s3 + $0x28] sm:$0xff]
      %v646 = vld [vmem:[%s3 + $0x30] sm:$0xff]
      %v647 = vld [vmem:[%s3 + $0x38] sm:$0xff]
      %v648 = vld [vmem:[%s3 + $0x40] sm:$0xff]
      %v649 = vld [vmem:[%s3 + $0x48] sm:$0xff]
      %v650 = vld [vmem:[%s3 + $0x50] sm:$0xff]
      %v651 = vld [vmem:[%s3 + $0x58] sm:$0xff]
      %v652 = vld [vmem:[%s3 + $0x60] sm:$0xff]
      %v653 = vld [vmem:[%s3 + $0x68] sm:$0xff]
      %v654 = vld [vmem:[%s3 + $0x70] sm:$0xff]
      %v655 = vld [vmem:[%s3 + $0x78] sm:$0xff]
      %vm656 = vcmask 523264
      %v658 = vsel %vm656, %v639, 0
      %660 = vmatpush.msra.mxu0 0.0
      %661 = vmatpush.msra.mxu0 0.0
      %662 = vmatpush.msra.mxu0 0.0
      %663 = vmatpush.msra.mxu0 0.0
      %664 = vmatpush.msra.mxu0 0.0
      %665 = vmatpush.msra.mxu0 0.0
      %666 = vmatpush.msra.mxu0 0.0
      %667 = vmatpush.msra.mxu0 0.0
      %668 = vmatpush.msra.mxu0 %v654
      %669 = vmatpush.msra.mxu0 %v652
      %670 = vmatpush.msra.mxu0 %v650
      %671 = vmatpush.msra.mxu0 %v648
      %672 = vmatpush.msra.mxu0 %v646
      %673 = vmatpush.msra.mxu0 %v644
      %674 = vmatpush.msra.mxu0 %v642
      %675 = vmatpush.msra.mxu0 %v640
      %676 = vmatmul.f32.gmra.mxu0 %v658
      %v677 = vpop.f32.mrf.mxu0
      %v678 = vadd.f32 0.0, %v677
      %679 = vdwg.mxu0
      %680 = vmatpush.msra.mxu0 0.0
      %681 = vmatpush.msra.mxu0 0.0
      %682 = vmatpush.msra.mxu0 0.0
      %683 = vmatpush.msra.mxu0 0.0
      %684 = vmatpush.msra.mxu0 0.0
      %685 = vmatpush.msra.mxu0 0.0
      %686 = vmatpush.msra.mxu0 0.0
      %687 = vmatpush.msra.mxu0 0.0
      %688 = vmatpush.msra.mxu0 %v655
      %689 = vmatpush.msra.mxu0 %v653
      %690 = vmatpush.msra.mxu0 %v651
      %691 = vmatpush.msra.mxu0 %v649
      %692 = vmatpush.msra.mxu0 %v647
      %693 = vmatpush.msra.mxu0 %v645
      %694 = vmatpush.msra.mxu0 %v643
      %695 = vmatpush.msra.mxu0 %v641
      %696 = vmatmul.f32.gmra.mxu0 %v658
      %v697 = vpop.f32.mrf.mxu0
      %v698 = vadd.f32 0.0, %v697
      %699 = vdwg.mxu0
      %v700 = vld [vmem:[%s625] sm:$0xff]
      %v701 = vld [vmem:[%s625 + $0x8] sm:$0xff]
      %v702 = vld [vmem:[%s6] sm:$0xff]
      %v703 = vld [vmem:[%s6 + $0x8] sm:$0xff]
      %v704 = vld [vmem:[%s7] sm:$0xff]
      %v705 = vld [vmem:[%s7 + $0x8] sm:$0xff]
      %706 = vrot.lane.b32.xlu0 %v700, 17
      %v707 = vpop.permute.xlu0 %706
      %708 = vrot.lane.b32.xlu0 %v678, 17
      %v709 = vpop.permute.xlu0 %708
      %710 = vrot.lane.b32.xlu0 %v701, 17
      %v711 = vpop.permute.xlu0 %710
      %712 = vrot.lane.b32.xlu0 %v698, 17
      %v713 = vpop.permute.xlu0 %712
      %v714 = vlaneseq
      %v715 = vand.u32 %v714, 127
      %vm716 = vcmp.lt.s32.totalorder %v715, 17
      %v717 = vsel %vm716, %v707, %v711
      %v718 = vsel %vm716, %v709, %v713
      %v719 = vsel %vm716, %v711, %v707
      %v720 = vsel %vm716, %v713, %v709
      %v721 = vperm.slane %v635, 0
      %v722 = vperm.slane %v636, 0
      %v723 = vmul.f32 %v719, %v721
      %v724 = vmul.f32 %v717, %v722
      %v725 = vmul.f32 %v720, %v721
      %v726 = vmul.f32 %v718, %v722
      %727 = vrot.lane.b32.xlu0 %v700, 16
      %v728 = vpop.permute.xlu0 %727
      %729 = vrot.lane.b32.xlu0 %v678, 16
      %v730 = vpop.permute.xlu0 %729
      %731 = vrot.lane.b32.xlu0 %v701, 16
      %v732 = vpop.permute.xlu0 %731
      %733 = vrot.lane.b32.xlu0 %v698, 16
      %v734 = vpop.permute.xlu0 %733
      %vm735 = vcmp.lt.s32.totalorder %v715, 16
      %v736 = vsel %vm735, %v728, %v732
      %v737 = vsel %vm735, %v730, %v734
      %v738 = vsel %vm735, %v732, %v728
      %v739 = vsel %vm735, %v734, %v730
      %v740 = vperm.slane %v635, 1
      %v741 = vperm.slane %v636, 1
      %v742 = vmul.f32 %v738, %v740
      %v743 = vmul.f32 %v736, %v741
      %v744 = vmul.f32 %v739, %v740
      %v745 = vmul.f32 %v737, %v741
      %746 = vrot.lane.b32.xlu0 %v700, 15
      %v747 = vpop.permute.xlu0 %746
      %748 = vrot.lane.b32.xlu0 %v678, 15
      %v749 = vpop.permute.xlu0 %748
      %750 = vrot.lane.b32.xlu0 %v701, 15
      %v751 = vpop.permute.xlu0 %750
      %752 = vrot.lane.b32.xlu0 %v698, 15
      %v753 = vpop.permute.xlu0 %752
      %vm754 = vcmp.lt.s32.totalorder %v715, 15
      %v755 = vsel %vm754, %v747, %v751
      %v756 = vsel %vm754, %v749, %v753
      %v757 = vsel %vm754, %v751, %v747
      %v758 = vsel %vm754, %v753, %v749
      %v759 = vperm.slane %v635, 2
      %v760 = vperm.slane %v636, 2
      %v761 = vmul.f32 %v757, %v759
      %v762 = vmul.f32 %v755, %v760
      %v763 = vmul.f32 %v758, %v759
      %v764 = vmul.f32 %v756, %v760
      %765 = vrot.lane.b32.xlu0 %v700, 1
      %v766 = vpop.permute.xlu0 %765
      %767 = vrot.lane.b32.xlu0 %v678, 1
      %v768 = vpop.permute.xlu0 %767
      %769 = vrot.lane.b32.xlu0 %v701, 1
      %v770 = vpop.permute.xlu0 %769
      %771 = vrot.lane.b32.xlu0 %v698, 1
      %v772 = vpop.permute.xlu0 %771
      %vm773 = vcmp.lt.s32.totalorder %v715, 1
      %v774 = vsel %vm773, %v766, %v770
      %v775 = vsel %vm773, %v768, %v772
      %v776 = vsel %vm773, %v770, %v766
      %v777 = vsel %vm773, %v772, %v768
      %v778 = vperm.slane %v635, 3
      %v779 = vperm.slane %v636, 3
      %v780 = vmul.f32 %v776, %v778
      %v781 = vmul.f32 %v774, %v779
      %v782 = vmul.f32 %v777, %v778
      %v783 = vmul.f32 %v775, %v779
      %784 = vrot.lane.b32.xlu0 %v700, 127
      %v785 = vpop.permute.xlu0 %784
      %786 = vrot.lane.b32.xlu0 %v678, 127
      %v787 = vpop.permute.xlu0 %786
      %788 = vrot.lane.b32.xlu0 %v701, 127
      %v789 = vpop.permute.xlu0 %788
      %790 = vrot.lane.b32.xlu0 %v698, 127
      %v791 = vpop.permute.xlu0 %790
      %vm792 = vcmp.lt.s32.totalorder %v715, 127
      %v793 = vsel %vm792, %v785, %v789
      %v794 = vsel %vm792, %v787, %v791
      %v795 = vsel %vm792, %v789, %v785
      %v796 = vsel %vm792, %v791, %v787
      %v797 = vperm.slane %v635, 5
      %v798 = vperm.slane %v636, 5
      %v799 = vmul.f32 %v793, %v797
      %v800 = vmul.f32 %v795, %v798
      %v801 = vmul.f32 %v794, %v797
      %v802 = vmul.f32 %v796, %v798
      %803 = vrot.lane.b32.xlu0 %v700, 113
      %v804 = vpop.permute.xlu0 %803
      %805 = vrot.lane.b32.xlu0 %v678, 113
      %v806 = vpop.permute.xlu0 %805
      %807 = vrot.lane.b32.xlu0 %v701, 113
      %v808 = vpop.permute.xlu0 %807
      %809 = vrot.lane.b32.xlu0 %v698, 113
      %v810 = vpop.permute.xlu0 %809
      %vm811 = vcmp.lt.s32.totalorder %v715, 113
      %v812 = vsel %vm811, %v804, %v808
      %v813 = vsel %vm811, %v806, %v810
      %v814 = vsel %vm811, %v808, %v804
      %v815 = vsel %vm811, %v810, %v806
      %v816 = vperm.slane %v635, 6
      %v817 = vperm.slane %v636, 6
      %v818 = vmul.f32 %v812, %v816
      %v819 = vmul.f32 %v814, %v817
      %v820 = vmul.f32 %v813, %v816
      %v821 = vmul.f32 %v815, %v817
      %822 = vrot.lane.b32.xlu0 %v700, 112
      %v823 = vpop.permute.xlu0 %822
      %824 = vrot.lane.b32.xlu0 %v678, 112
      %v825 = vpop.permute.xlu0 %824
      %826 = vrot.lane.b32.xlu0 %v701, 112
      %v827 = vpop.permute.xlu0 %826
      %828 = vrot.lane.b32.xlu0 %v698, 112
      %v829 = vpop.permute.xlu0 %828
      %vm830 = vcmp.lt.s32.totalorder %v715, 112
      %v831 = vsel %vm830, %v823, %v827
      %v832 = vsel %vm830, %v825, %v829
      %v833 = vsel %vm830, %v827, %v823
      %v834 = vsel %vm830, %v829, %v825
      %v835 = vperm.slane %v635, 7
      %v836 = vperm.slane %v636, 7
      %v837 = vmul.f32 %v831, %v835
      %v838 = vmul.f32 %v833, %v836
      %v839 = vmul.f32 %v832, %v835
      %v840 = vmul.f32 %v834, %v836
      %841 = vrot.lane.b32.xlu0 %v700, 111
      %v842 = vpop.permute.xlu0 %841
      %843 = vrot.lane.b32.xlu0 %v678, 111
      %v844 = vpop.permute.xlu0 %843
      %845 = vrot.lane.b32.xlu0 %v701, 111
      %v846 = vpop.permute.xlu0 %845
      %847 = vrot.lane.b32.xlu0 %v698, 111
      %v848 = vpop.permute.xlu0 %847
      %vm849 = vcmp.lt.s32.totalorder %v715, 111
      %v850 = vsel %vm849, %v842, %v846
      %v851 = vsel %vm849, %v844, %v848
      %v852 = vsel %vm849, %v846, %v842
      %v853 = vsel %vm849, %v848, %v844
      %v854 = vperm.slane %v637, 0
      %v855 = vperm.slane %v638, 0
      %v856 = vmul.f32 %v850, %v854
      %v857 = vmul.f32 %v852, %v855
      %v858 = vmul.f32 %v851, %v854
      %v859 = vmul.f32 %v853, %v855
      %v860 = vpack.c.bf16 %v725, %v723
      %v861 = vpack.c.bf16 %v726, %v724
      %v862 = vpack.c.bf16 %v744, %v742
      %v863 = vpack.c.bf16 %v745, %v743
      %v864 = vpack.c.bf16 %v763, %v761
      %v865 = vpack.c.bf16 %v764, %v762
      %v866 = vpack.c.bf16 %v782, %v780
      %v867 = vpack.c.bf16 %v783, %v781
      %v868 = vpack.c.bf16 %v678, %v700
      %v869 = vpack.c.bf16 %v698, %v701
      %v870 = vpack.c.bf16 %v801, %v799
      %v871 = vpack.c.bf16 %v802, %v800
      %v872 = vpack.c.bf16 %v820, %v818
      %v873 = vpack.c.bf16 %v821, %v819
      %v874 = vpack.c.bf16 %v839, %v837
      %v875 = vpack.c.bf16 %v840, %v838
      %v876 = vpack.c.bf16 %v858, %v856
      %v877 = vpack.c.bf16 %v859, %v857
      %v878 = vld [vmem:[%s5] sm:$0xff]
      %v879 = vld [vmem:[%s5 + $0x8] sm:$0xff]
      %v882 = vunpack.c.l.b16 %v878
      %v883 = vunpack.c.h.b16 %v878
      %v884 = vunpack.c.l.b16 %v879
      %v885 = vunpack.c.h.b16 %v879
      %v886 = vpack.c.b16 %v884, %v882
      %v887 = vpack.c.b16 %v885, %v883
      %vm889 = vcmask 130048
      %v891 = vsel %vm889, %v887, 0
      %893 = vmatpush.bf16.msra.mxu0 %v874
      %894 = vmatpush.bf16.msra.mxu0 %v872
      %895 = vmatpush.bf16.msra.mxu0 %v870
      %896 = vmatpush.bf16.msra.mxu0 %v868
      %897 = vmatpush.bf16.msra.mxu0 %v866
      %898 = vmatpush.bf16.msra.mxu0 %v864
      %899 = vmatpush.bf16.msra.mxu0 %v862
      %900 = vmatpush.bf16.msra.mxu0 %v860
      %901 = vmatmul.bf16.gmra.mxu0 %v886
      %v902 = vpop.f32.mrf.mxu0
      %v903 = vadd.f32 0.0, %v902
      %v904 = vpop.f32.mrf.mxu0
      %v905 = vadd.f32 0.0, %v904
      %906 = vdwg.mxu0
      %907 = vmatpush.bf16.msra.mxu0 0
      %908 = vmatpush.bf16.msra.mxu0 0
      %909 = vmatpush.bf16.msra.mxu0 0
      %910 = vmatpush.bf16.msra.mxu0 0
      %911 = vmatpush.bf16.msra.mxu0 0
      %912 = vmatpush.bf16.msra.mxu0 0
      %913 = vmatpush.bf16.msra.mxu0 0
      %914 = vmatpush.bf16.msra.mxu0 %v876
      %915 = vmatmul.bf16.gmra.mxu0 %v891
      %v916 = vpop.f32.mrf.mxu0
      %v917 = vadd.f32 %v903, %v916
      %v918 = vpop.f32.mrf.mxu0
      %v919 = vadd.f32 %v905, %v918
      %920 = vdwg.mxu0
      %921 = vmatpush.bf16.msra.mxu0 %v875
      %922 = vmatpush.bf16.msra.mxu0 %v873
      %923 = vmatpush.bf16.msra.mxu0 %v871
      %924 = vmatpush.bf16.msra.mxu0 %v869
      %925 = vmatpush.bf16.msra.mxu0 %v867
      %926 = vmatpush.bf16.msra.mxu0 %v865
      %927 = vmatpush.bf16.msra.mxu0 %v863
      %928 = vmatpush.bf16.msra.mxu0 %v861
      %929 = vmatmul.bf16.gmra.mxu0 %v886
      %v930 = vpop.f32.mrf.mxu0
      %v931 = vadd.f32 0.0, %v930
      %v932 = vpop.f32.mrf.mxu0
      %v933 = vadd.f32 0.0, %v932
      %934 = vdwg.mxu0
      %935 = vmatpush.bf16.msra.mxu0 0
      %936 = vmatpush.bf16.msra.mxu0 0
      %937 = vmatpush.bf16.msra.mxu0 0
      %938 = vmatpush.bf16.msra.mxu0 0
      %939 = vmatpush.bf16.msra.mxu0 0
      %940 = vmatpush.bf16.msra.mxu0 0
      %941 = vmatpush.bf16.msra.mxu0 0
      %942 = vmatpush.bf16.msra.mxu0 %v877
      %943 = vmatmul.bf16.gmra.mxu0 %v891
      %v944 = vpop.f32.mrf.mxu0
      %v945 = vadd.f32 %v931, %v944
      %v946 = vpop.f32.mrf.mxu0
      %v947 = vadd.f32 %v933, %v946
      %948 = vdwg.mxu0
      %v949 = vadd.f32 %v917, %v945
      %950 = vadd.xlane.f32.xlu0 %v949
      %v951 = vpop.xlane.xlu0 %950
      %v952 = vadd.f32 %v919, %v947
      %953 = vadd.xlane.f32.xlu0 %v952
      %v954 = vpop.xlane.xlu0 %953
      %v955 = vrcp.pop 256.0
      %v956 = vmul.f32 256.0, %v955
      %v957 = vsub.f32 1.0, %v956
      %v958 = vmul.f32 %v955, %v957
      %v959 = vadd.f32 %v955, %v958
      %vm960 = vweird.f32 %v955
      %v961 = vsel %vm960, %v955, %v959
      %v962 = vmul.f32 %v951, %v961
      %v963 = vmul.f32 %v954, %v961
      %v964 = vadd.f32 %v962, %v963
      %v965 = vrot.slane %v964, 4
      %v966 = vadd.f32 %v964, %v965
      %v967 = vrot.slane %v966, 2
      %v968 = vadd.f32 %v966, %v967
      %v969 = vrot.slane %v968, 1
      %v970 = vadd.f32 %v968, %v969
      %v971 = vrcp.pop 16.0
      %v972 = vmul.f32 16.0, %v971
      %v973 = vsub.f32 1.0, %v972
      %v974 = vmul.f32 %v971, %v973
      %v975 = vadd.f32 %v971, %v974
      %vm976 = vweird.f32 %v971
      %v977 = vsel %vm976, %v971, %v975
      %v978 = vmul.f32 %v970, %v977
      %v979 = vsub.f32 %v917, %v978
      %v980 = vsub.f32 %v945, %v978
      %v981 = vsub.f32 %v919, %v978
      %v982 = vsub.f32 %v947, %v978
      %v983 = vmul.f32 %v979, %v979
      %v984 = vmul.f32 %v980, %v980
      %v985 = vmul.f32 %v981, %v981
      %v986 = vmul.f32 %v982, %v982
      %v987 = vadd.f32 %v983, %v984
      %988 = vadd.xlane.f32.xlu0 %v987
      %v989 = vpop.xlane.xlu0 %988
      %v990 = vadd.f32 %v985, %v986
      %991 = vadd.xlane.f32.xlu0 %v990
      %v992 = vpop.xlane.xlu0 %991
      %v993 = vmul.f32 %v989, %v961
      %v994 = vmul.f32 %v992, %v961
      %v995 = vadd.f32 %v993, %v994
      %v996 = vrot.slane %v995, 4
      %v997 = vadd.f32 %v995, %v996
      %v998 = vrot.slane %v997, 2
      %v999 = vadd.f32 %v997, %v998
      %v1000 = vrot.slane %v999, 1
      %v1001 = vadd.f32 %v999, %v1000
      %v1002 = vmul.f32 %v1001, %v977
      %v1003 = vadd.f32 %v1002, 1e-05
      %v1004 = vrsqrt.pop %v1003
      %v1005 = vmul.f32 %v1004, %v1003
      %v1006 = vmul.f32 %v1005, %v1004
      %v1007 = vmul.f32 0.5, %v1006
      %v1008 = vsub.f32 1.5, %v1007
      %v1009 = vmul.f32 %v1004, %v1008
      %vm1010 = vweird.f32 %v1003
      %vm1011 = vweird.f32 %v1004
      %vm1012 = vmor %vm1010, %vm1011
      %v1013 = vsel %vm1012, %v1004, %v1009
      %v1014 = vmul.f32 %v979, %v1013
      %v1015 = vmul.f32 %v980, %v1013
      %v1016 = vmul.f32 %v981, %v1013
      %v1017 = vmul.f32 %v982, %v1013
      %1019 = vset.pattern.permute.xlu0 0
      %1020 = vperm.xlu0 %1019, %v702
      %v1021 = vpop.permute.xlu0 %1020
      %1024 = vset.pattern.permute.xlu0 0
      %1025 = vperm.xlu0 %1024, %v703
      %v1026 = vpop.permute.xlu0 %1025
      %v1028 = vmul.f32 %v1014, %v1021
      %v1029 = vmul.f32 %v1015, %v1021
      %v1030 = vmul.f32 %v1016, %v1026
      %v1031 = vmul.f32 %v1017, %v1026
      %1033 = vset.pattern.permute.xlu0 0
      %1034 = vperm.xlu0 %1033, %v704
      %v1035 = vpop.permute.xlu0 %1034
      %1038 = vset.pattern.permute.xlu0 0
      %1039 = vperm.xlu0 %1038, %v705
      %v1040 = vpop.permute.xlu0 %1039
      %v1042 = vadd.f32 %v1028, %v1035
      %v1043 = vadd.f32 %v1029, %v1035
      %v1044 = vadd.f32 %v1030, %v1040
      %v1045 = vadd.f32 %v1031, %v1040
      %v1046 = vmul.f32 %v1042, %v1042
      %v1047 = vmul.f32 %v1043, %v1043
      %v1048 = vmul.f32 %v1044, %v1044
      %v1049 = vmul.f32 %v1045, %v1045
      %v1050 = vmul.f32 %v1042, %v1046
      %v1051 = vmul.f32 %v1043, %v1047
      %v1052 = vmul.f32 %v1044, %v1048
      %v1053 = vmul.f32 %v1045, %v1049
      %v1054 = vmul.f32 %v1050, 0.044715
      %v1055 = vmul.f32 %v1051, 0.044715
      %v1056 = vmul.f32 %v1052, 0.044715
      %v1057 = vmul.f32 %v1053, 0.044715
      %v1058 = vadd.f32 %v1042, %v1054
      %v1059 = vadd.f32 %v1043, %v1055
      %v1060 = vadd.f32 %v1044, %v1056
      %v1061 = vadd.f32 %v1045, %v1057
      %v1062 = vmul.f32 %v1058, 0.7978846
      %v1063 = vmul.f32 %v1059, 0.7978846
      %v1064 = vmul.f32 %v1060, 0.7978846
      %v1065 = vmul.f32 %v1061, 0.7978846
      %v1066 = vtanh.pop %v1062
      %v1067 = vtanh.pop %v1063
      %v1068 = vtanh.pop %v1064
      %v1069 = vtanh.pop %v1065
      %v1070 = vadd.f32 %v1066, 1.0
      %v1071 = vadd.f32 %v1067, 1.0
      %v1072 = vadd.f32 %v1068, 1.0
      %v1073 = vadd.f32 %v1069, 1.0
      %v1074 = vmul.f32 %v1070, 0.5
      %v1075 = vmul.f32 %v1071, 0.5
      %v1076 = vmul.f32 %v1072, 0.5
      %v1077 = vmul.f32 %v1073, 0.5
      %v1078 = vmul.f32 %v1042, %v1074
      %v1079 = vmul.f32 %v1043, %v1075
      %v1080 = vmul.f32 %v1044, %v1076
      %v1081 = vmul.f32 %v1045, %v1077
      %v1082 = vld [vmem:[%s9] sm:$0xff]
      %v1083 = vld [vmem:[%s9 + $0x8] sm:$0xff]
      %v1084 = vld [vmem:[%s10] sm:$0xff]
      %v1085 = vld [vmem:[%s10 + $0x8] sm:$0xff]
      %1086 = vrot.lane.b32.xlu0 %v1078, 17
      %v1087 = vpop.permute.xlu0 %1086
      %1088 = vrot.lane.b32.xlu0 %v1080, 17
      %v1089 = vpop.permute.xlu0 %1088
      %1090 = vrot.lane.b32.xlu0 %v1079, 17
      %v1091 = vpop.permute.xlu0 %1090
      %1092 = vrot.lane.b32.xlu0 %v1081, 17
      %v1093 = vpop.permute.xlu0 %1092
      %v1094 = vsel %vm716, %v1087, %v1091
      %v1095 = vsel %vm716, %v1089, %v1093
      %v1096 = vsel %vm716, %v1091, %v1087
      %v1097 = vsel %vm716, %v1093, %v1089
      %v1098 = vmul.f32 %v1096, %v721
      %v1099 = vmul.f32 %v1094, %v722
      %v1100 = vmul.f32 %v1097, %v721
      %v1101 = vmul.f32 %v1095, %v722
      %1102 = vrot.lane.b32.xlu0 %v1078, 16
      %v1103 = vpop.permute.xlu0 %1102
      %1104 = vrot.lane.b32.xlu0 %v1080, 16
      %v1105 = vpop.permute.xlu0 %1104
      %1106 = vrot.lane.b32.xlu0 %v1079, 16
      %v1107 = vpop.permute.xlu0 %1106
      %1108 = vrot.lane.b32.xlu0 %v1081, 16
      %v1109 = vpop.permute.xlu0 %1108
      %v1110 = vsel %vm735, %v1103, %v1107
      %v1111 = vsel %vm735, %v1105, %v1109
      %v1112 = vsel %vm735, %v1107, %v1103
      %v1113 = vsel %vm735, %v1109, %v1105
      %v1114 = vmul.f32 %v1112, %v740
      %v1115 = vmul.f32 %v1110, %v741
      %v1116 = vmul.f32 %v1113, %v740
      %v1117 = vmul.f32 %v1111, %v741
      %1118 = vrot.lane.b32.xlu0 %v1078, 15
      %v1119 = vpop.permute.xlu0 %1118
      %1120 = vrot.lane.b32.xlu0 %v1080, 15
      %v1121 = vpop.permute.xlu0 %1120
      %1122 = vrot.lane.b32.xlu0 %v1079, 15
      %v1123 = vpop.permute.xlu0 %1122
      %1124 = vrot.lane.b32.xlu0 %v1081, 15
      %v1125 = vpop.permute.xlu0 %1124
      %v1126 = vsel %vm754, %v1119, %v1123
      %v1127 = vsel %vm754, %v1121, %v1125
      %v1128 = vsel %vm754, %v1123, %v1119
      %v1129 = vsel %vm754, %v1125, %v1121
      %v1130 = vmul.f32 %v1128, %v759
      %v1131 = vmul.f32 %v1126, %v760
      %v1132 = vmul.f32 %v1129, %v759
      %v1133 = vmul.f32 %v1127, %v760
      %1134 = vrot.lane.b32.xlu0 %v1078, 1
      %v1135 = vpop.permute.xlu0 %1134
      %1136 = vrot.lane.b32.xlu0 %v1080, 1
      %v1137 = vpop.permute.xlu0 %1136
      %1138 = vrot.lane.b32.xlu0 %v1079, 1
      %v1139 = vpop.permute.xlu0 %1138
      %1140 = vrot.lane.b32.xlu0 %v1081, 1
      %v1141 = vpop.permute.xlu0 %1140
      %v1142 = vsel %vm773, %v1135, %v1139
      %v1143 = vsel %vm773, %v1137, %v1141
      %v1144 = vsel %vm773, %v1139, %v1135
      %v1145 = vsel %vm773, %v1141, %v1137
      %v1146 = vmul.f32 %v1144, %v778
      %v1147 = vmul.f32 %v1142, %v779
      %v1148 = vmul.f32 %v1145, %v778
      %v1149 = vmul.f32 %v1143, %v779
      %1150 = vrot.lane.b32.xlu0 %v1078, 127
      %v1151 = vpop.permute.xlu0 %1150
      %1152 = vrot.lane.b32.xlu0 %v1080, 127
      %v1153 = vpop.permute.xlu0 %1152
      %1154 = vrot.lane.b32.xlu0 %v1079, 127
      %v1155 = vpop.permute.xlu0 %1154
      %1156 = vrot.lane.b32.xlu0 %v1081, 127
      %v1157 = vpop.permute.xlu0 %1156
      %v1158 = vsel %vm792, %v1151, %v1155
      %v1159 = vsel %vm792, %v1153, %v1157
      %v1160 = vsel %vm792, %v1155, %v1151
      %v1161 = vsel %vm792, %v1157, %v1153
      %v1162 = vmul.f32 %v1158, %v797
      %v1163 = vmul.f32 %v1160, %v798
      %v1164 = vmul.f32 %v1159, %v797
      %v1165 = vmul.f32 %v1161, %v798
      %1166 = vrot.lane.b32.xlu0 %v1078, 113
      %v1167 = vpop.permute.xlu0 %1166
      %1168 = vrot.lane.b32.xlu0 %v1080, 113
      %v1169 = vpop.permute.xlu0 %1168
      %1170 = vrot.lane.b32.xlu0 %v1079, 113
      %v1171 = vpop.permute.xlu0 %1170
      %1172 = vrot.lane.b32.xlu0 %v1081, 113
      %v1173 = vpop.permute.xlu0 %1172
      %v1174 = vsel %vm811, %v1167, %v1171
      %v1175 = vsel %vm811, %v1169, %v1173
      %v1176 = vsel %vm811, %v1171, %v1167
      %v1177 = vsel %vm811, %v1173, %v1169
      %v1178 = vmul.f32 %v1174, %v816
      %v1179 = vmul.f32 %v1176, %v817
      %v1180 = vmul.f32 %v1175, %v816
      %v1181 = vmul.f32 %v1177, %v817
      %1182 = vrot.lane.b32.xlu0 %v1078, 112
      %v1183 = vpop.permute.xlu0 %1182
      %1184 = vrot.lane.b32.xlu0 %v1080, 112
      %v1185 = vpop.permute.xlu0 %1184
      %1186 = vrot.lane.b32.xlu0 %v1079, 112
      %v1187 = vpop.permute.xlu0 %1186
      %1188 = vrot.lane.b32.xlu0 %v1081, 112
      %v1189 = vpop.permute.xlu0 %1188
      %v1190 = vsel %vm830, %v1183, %v1187
      %v1191 = vsel %vm830, %v1185, %v1189
      %v1192 = vsel %vm830, %v1187, %v1183
      %v1193 = vsel %vm830, %v1189, %v1185
      %v1194 = vmul.f32 %v1190, %v835
      %v1195 = vmul.f32 %v1192, %v836
      %v1196 = vmul.f32 %v1191, %v835
      %v1197 = vmul.f32 %v1193, %v836
      %1198 = vrot.lane.b32.xlu0 %v1078, 111
      %v1199 = vpop.permute.xlu0 %1198
      %1200 = vrot.lane.b32.xlu0 %v1080, 111
      %v1201 = vpop.permute.xlu0 %1200
      %1202 = vrot.lane.b32.xlu0 %v1079, 111
      %v1203 = vpop.permute.xlu0 %1202
      %1204 = vrot.lane.b32.xlu0 %v1081, 111
      %v1205 = vpop.permute.xlu0 %1204
      %v1206 = vsel %vm849, %v1199, %v1203
      %v1207 = vsel %vm849, %v1201, %v1205
      %v1208 = vsel %vm849, %v1203, %v1199
      %v1209 = vsel %vm849, %v1205, %v1201
      %v1210 = vmul.f32 %v1206, %v854
      %v1211 = vmul.f32 %v1208, %v855
      %v1212 = vmul.f32 %v1207, %v854
      %v1213 = vmul.f32 %v1209, %v855
      %v1214 = vpack.c.bf16 %v1100, %v1098
      %v1215 = vpack.c.bf16 %v1101, %v1099
      %v1216 = vpack.c.bf16 %v1116, %v1114
      %v1217 = vpack.c.bf16 %v1117, %v1115
      %v1218 = vpack.c.bf16 %v1132, %v1130
      %v1219 = vpack.c.bf16 %v1133, %v1131
      %v1220 = vpack.c.bf16 %v1148, %v1146
      %v1221 = vpack.c.bf16 %v1149, %v1147
      %v1222 = vpack.c.bf16 %v1080, %v1078
      %v1223 = vpack.c.bf16 %v1081, %v1079
      %v1224 = vpack.c.bf16 %v1164, %v1162
      %v1225 = vpack.c.bf16 %v1165, %v1163
      %v1226 = vpack.c.bf16 %v1180, %v1178
      %v1227 = vpack.c.bf16 %v1181, %v1179
      %v1228 = vpack.c.bf16 %v1196, %v1194
      %v1229 = vpack.c.bf16 %v1197, %v1195
      %v1230 = vpack.c.bf16 %v1212, %v1210
      %v1231 = vpack.c.bf16 %v1213, %v1211
      %v1232 = vld [vmem:[%s8] sm:$0xff]
      %v1233 = vld [vmem:[%s8 + $0x8] sm:$0xff]
      %v1236 = vunpack.c.l.b16 %v1232
      %v1237 = vunpack.c.h.b16 %v1232
      %v1238 = vunpack.c.l.b16 %v1233
      %v1239 = vunpack.c.h.b16 %v1233
      %v1240 = vpack.c.b16 %v1238, %v1236
      %v1241 = vpack.c.b16 %v1239, %v1237
      %v1244 = vsel %vm889, %v1241, 0
      %1246 = vmatpush.bf16.msra.mxu0 %v1228
      %1247 = vmatpush.bf16.msra.mxu0 %v1226
      %1248 = vmatpush.bf16.msra.mxu0 %v1224
      %1249 = vmatpush.bf16.msra.mxu0 %v1222
      %1250 = vmatpush.bf16.msra.mxu0 %v1220
      %1251 = vmatpush.bf16.msra.mxu0 %v1218
      %1252 = vmatpush.bf16.msra.mxu0 %v1216
      %1253 = vmatpush.bf16.msra.mxu0 %v1214
      %1254 = vmatmul.bf16.gmra.mxu0 %v1240
      %v1255 = vpop.f32.mrf.mxu0
      %v1256 = vadd.f32 0.0, %v1255
      %v1257 = vpop.f32.mrf.mxu0
      %v1258 = vadd.f32 0.0, %v1257
      %1259 = vdwg.mxu0
      %1260 = vmatpush.bf16.msra.mxu0 0
      %1261 = vmatpush.bf16.msra.mxu0 0
      %1262 = vmatpush.bf16.msra.mxu0 0
      %1263 = vmatpush.bf16.msra.mxu0 0
      %1264 = vmatpush.bf16.msra.mxu0 0
      %1265 = vmatpush.bf16.msra.mxu0 0
      %1266 = vmatpush.bf16.msra.mxu0 0
      %1267 = vmatpush.bf16.msra.mxu0 %v1230
      %1268 = vmatmul.bf16.gmra.mxu0 %v1244
      %v1269 = vpop.f32.mrf.mxu0
      %v1270 = vadd.f32 %v1256, %v1269
      %v1271 = vpop.f32.mrf.mxu0
      %v1272 = vadd.f32 %v1258, %v1271
      %1273 = vdwg.mxu0
      %1274 = vmatpush.bf16.msra.mxu0 %v1229
      %1275 = vmatpush.bf16.msra.mxu0 %v1227
      %1276 = vmatpush.bf16.msra.mxu0 %v1225
      %1277 = vmatpush.bf16.msra.mxu0 %v1223
      %1278 = vmatpush.bf16.msra.mxu0 %v1221
      %1279 = vmatpush.bf16.msra.mxu0 %v1219
      %1280 = vmatpush.bf16.msra.mxu0 %v1217
      %1281 = vmatpush.bf16.msra.mxu0 %v1215
      %1282 = vmatmul.bf16.gmra.mxu0 %v1240
      %v1283 = vpop.f32.mrf.mxu0
      %v1284 = vadd.f32 0.0, %v1283
      %v1285 = vpop.f32.mrf.mxu0
      %v1286 = vadd.f32 0.0, %v1285
      %1287 = vdwg.mxu0
      %1288 = vmatpush.bf16.msra.mxu0 0
      %1289 = vmatpush.bf16.msra.mxu0 0
      %1290 = vmatpush.bf16.msra.mxu0 0
      %1291 = vmatpush.bf16.msra.mxu0 0
      %1292 = vmatpush.bf16.msra.mxu0 0
      %1293 = vmatpush.bf16.msra.mxu0 0
      %1294 = vmatpush.bf16.msra.mxu0 0
      %1295 = vmatpush.bf16.msra.mxu0 %v1231
      %1296 = vmatmul.bf16.gmra.mxu0 %v1244
      %v1297 = vpop.f32.mrf.mxu0
      %v1298 = vadd.f32 %v1284, %v1297
      %v1299 = vpop.f32.mrf.mxu0
      %v1300 = vadd.f32 %v1286, %v1299
      %1301 = vdwg.mxu0
      %v1302 = vadd.f32 %v1270, %v1298
      %1303 = vadd.xlane.f32.xlu0 %v1302
      %v1304 = vpop.xlane.xlu0 %1303
      %v1305 = vadd.f32 %v1272, %v1300
      %1306 = vadd.xlane.f32.xlu0 %v1305
      %v1307 = vpop.xlane.xlu0 %1306
      %v1308 = vmul.f32 %v1304, %v961
      %v1309 = vmul.f32 %v1307, %v961
      %v1310 = vadd.f32 %v1308, %v1309
      %v1311 = vrot.slane %v1310, 4
      %v1312 = vadd.f32 %v1310, %v1311
      %v1313 = vrot.slane %v1312, 2
      %v1314 = vadd.f32 %v1312, %v1313
      %v1315 = vrot.slane %v1314, 1
      %v1316 = vadd.f32 %v1314, %v1315
      %v1317 = vmul.f32 %v1316, %v977
      %v1318 = vsub.f32 %v1270, %v1317
      %v1319 = vsub.f32 %v1298, %v1317
      %v1320 = vsub.f32 %v1272, %v1317
      %v1321 = vsub.f32 %v1300, %v1317
      %v1322 = vmul.f32 %v1318, %v1318
      %v1323 = vmul.f32 %v1319, %v1319
      %v1324 = vmul.f32 %v1320, %v1320
      %v1325 = vmul.f32 %v1321, %v1321
      %v1326 = vadd.f32 %v1322, %v1323
      %1327 = vadd.xlane.f32.xlu0 %v1326
      %v1328 = vpop.xlane.xlu0 %1327
      %v1329 = vadd.f32 %v1324, %v1325
      %1330 = vadd.xlane.f32.xlu0 %v1329
      %v1331 = vpop.xlane.xlu0 %1330
      %v1332 = vmul.f32 %v1328, %v961
      %v1333 = vmul.f32 %v1331, %v961
      %v1334 = vadd.f32 %v1332, %v1333
      %v1335 = vrot.slane %v1334, 4
      %v1336 = vadd.f32 %v1334, %v1335
      %v1337 = vrot.slane %v1336, 2
      %v1338 = vadd.f32 %v1336, %v1337
      %v1339 = vrot.slane %v1338, 1
      %v1340 = vadd.f32 %v1338, %v1339
      %v1341 = vmul.f32 %v1340, %v977
      %v1342 = vadd.f32 %v1341, 1e-05
      %v1343 = vrsqrt.pop %v1342
      %v1344 = vmul.f32 %v1343, %v1342
      %v1345 = vmul.f32 %v1344, %v1343
      %v1346 = vmul.f32 0.5, %v1345
      %v1347 = vsub.f32 1.5, %v1346
      %v1348 = vmul.f32 %v1343, %v1347
      %vm1349 = vweird.f32 %v1342
      %vm1350 = vweird.f32 %v1343
      %vm1351 = vmor %vm1349, %vm1350
      %v1352 = vsel %vm1351, %v1343, %v1348
      %v1353 = vmul.f32 %v1318, %v1352
      %v1354 = vmul.f32 %v1319, %v1352
      %v1355 = vmul.f32 %v1320, %v1352
      %v1356 = vmul.f32 %v1321, %v1352
      %1358 = vset.pattern.permute.xlu0 0
      %1359 = vperm.xlu0 %1358, %v1082
      %v1360 = vpop.permute.xlu0 %1359
      %1363 = vset.pattern.permute.xlu0 0
      %1364 = vperm.xlu0 %1363, %v1083
      %v1365 = vpop.permute.xlu0 %1364
      %v1367 = vmul.f32 %v1353, %v1360
      %v1368 = vmul.f32 %v1354, %v1360
      %v1369 = vmul.f32 %v1355, %v1365
      %v1370 = vmul.f32 %v1356, %v1365
      %1372 = vset.pattern.permute.xlu0 0
      %1373 = vperm.xlu0 %1372, %v1084
      %v1374 = vpop.permute.xlu0 %1373
      %1377 = vset.pattern.permute.xlu0 0
      %1378 = vperm.xlu0 %1377, %v1085
      %v1379 = vpop.permute.xlu0 %1378
      %v1381 = vadd.f32 %v1367, %v1374
      %v1382 = vadd.f32 %v1368, %v1374
      %v1383 = vadd.f32 %v1369, %v1379
      %v1384 = vadd.f32 %v1370, %v1379
      %v1385 = vadd.f32 %v700, %v1381
      %v1386 = vadd.f32 %v701, %v1382
      %v1387 = vadd.f32 %v678, %v1383
      %v1388 = vadd.f32 %v698, %v1384
      %v1389 = vmul.f32 %v1385, %v1385
      %v1390 = vmul.f32 %v1386, %v1386
      %v1391 = vmul.f32 %v1387, %v1387
      %v1392 = vmul.f32 %v1388, %v1388
      %v1393 = vmul.f32 %v1385, %v1389
      %v1394 = vmul.f32 %v1386, %v1390
      %v1395 = vmul.f32 %v1387, %v1391
      %v1396 = vmul.f32 %v1388, %v1392
      %v1397 = vmul.f32 %v1393, 0.044715
      %v1398 = vmul.f32 %v1394, 0.044715
      %v1399 = vmul.f32 %v1395, 0.044715
      %v1400 = vmul.f32 %v1396, 0.044715
      %v1401 = vadd.f32 %v1385, %v1397
      %v1402 = vadd.f32 %v1386, %v1398
      %v1403 = vadd.f32 %v1387, %v1399
      %v1404 = vadd.f32 %v1388, %v1400
      %v1405 = vmul.f32 %v1401, 0.7978846
      %v1406 = vmul.f32 %v1402, 0.7978846
      %v1407 = vmul.f32 %v1403, 0.7978846
      %v1408 = vmul.f32 %v1404, 0.7978846
      %v1409 = vtanh.pop %v1405
      %v1410 = vtanh.pop %v1406
      %v1411 = vtanh.pop %v1407
      %v1412 = vtanh.pop %v1408
      %v1413 = vadd.f32 %v1409, 1.0
      %v1414 = vadd.f32 %v1410, 1.0
      %v1415 = vadd.f32 %v1411, 1.0
      %v1416 = vadd.f32 %v1412, 1.0
      %v1417 = vmul.f32 %v1413, 0.5
      %v1418 = vmul.f32 %v1414, 0.5
      %v1419 = vmul.f32 %v1415, 0.5
      %v1420 = vmul.f32 %v1416, 0.5
      %v1421 = vmul.f32 %v1385, %v1417
      %v1422 = vmul.f32 %v1386, %v1418
      %v1423 = vmul.f32 %v1387, %v1419
      %v1424 = vmul.f32 %v1388, %v1420
      %v1425 = vld [vmem:[%s12] sm:$0xff]
      %v1426 = vld [vmem:[%s13] sm:$0xff]
      %1427 = vrot.lane.b32.xlu0 %v1421, 17
      %v1428 = vpop.permute.xlu0 %1427
      %1429 = vrot.lane.b32.xlu0 %v1423, 17
      %v1430 = vpop.permute.xlu0 %1429
      %1431 = vrot.lane.b32.xlu0 %v1422, 17
      %v1432 = vpop.permute.xlu0 %1431
      %1433 = vrot.lane.b32.xlu0 %v1424, 17
      %v1434 = vpop.permute.xlu0 %1433
      %v1435 = vsel %vm716, %v1428, %v1432
      %v1436 = vsel %vm716, %v1430, %v1434
      %v1437 = vsel %vm716, %v1432, %v1428
      %v1438 = vsel %vm716, %v1434, %v1430
      %v1439 = vmul.f32 %v1437, %v721
      %v1440 = vmul.f32 %v1435, %v722
      %v1441 = vmul.f32 %v1438, %v721
      %v1442 = vmul.f32 %v1436, %v722
      %1443 = vrot.lane.b32.xlu0 %v1421, 16
      %v1444 = vpop.permute.xlu0 %1443
      %1445 = vrot.lane.b32.xlu0 %v1423, 16
      %v1446 = vpop.permute.xlu0 %1445
      %1447 = vrot.lane.b32.xlu0 %v1422, 16
      %v1448 = vpop.permute.xlu0 %1447
      %1449 = vrot.lane.b32.xlu0 %v1424, 16
      %v1450 = vpop.permute.xlu0 %1449
      %v1451 = vsel %vm735, %v1444, %v1448
      %v1452 = vsel %vm735, %v1446, %v1450
      %v1453 = vsel %vm735, %v1448, %v1444
      %v1454 = vsel %vm735, %v1450, %v1446
      %v1455 = vmul.f32 %v1453, %v740
      %v1456 = vmul.f32 %v1451, %v741
      %v1457 = vmul.f32 %v1454, %v740
      %v1458 = vmul.f32 %v1452, %v741
      %1459 = vrot.lane.b32.xlu0 %v1421, 15
      %v1460 = vpop.permute.xlu0 %1459
      %1461 = vrot.lane.b32.xlu0 %v1423, 15
      %v1462 = vpop.permute.xlu0 %1461
      %1463 = vrot.lane.b32.xlu0 %v1422, 15
      %v1464 = vpop.permute.xlu0 %1463
      %1465 = vrot.lane.b32.xlu0 %v1424, 15
      %v1466 = vpop.permute.xlu0 %1465
      %v1467 = vsel %vm754, %v1460, %v1464
      %v1468 = vsel %vm754, %v1462, %v1466
      %v1469 = vsel %vm754, %v1464, %v1460
      %v1470 = vsel %vm754, %v1466, %v1462
      %v1471 = vmul.f32 %v1469, %v759
      %v1472 = vmul.f32 %v1467, %v760
      %v1473 = vmul.f32 %v1470, %v759
      %v1474 = vmul.f32 %v1468, %v760
      %1475 = vrot.lane.b32.xlu0 %v1421, 1
      %v1476 = vpop.permute.xlu0 %1475
      %1477 = vrot.lane.b32.xlu0 %v1423, 1
      %v1478 = vpop.permute.xlu0 %1477
      %1479 = vrot.lane.b32.xlu0 %v1422, 1
      %v1480 = vpop.permute.xlu0 %1479
      %1481 = vrot.lane.b32.xlu0 %v1424, 1
      %v1482 = vpop.permute.xlu0 %1481
      %v1483 = vsel %vm773, %v1476, %v1480
      %v1484 = vsel %vm773, %v1478, %v1482
      %v1485 = vsel %vm773, %v1480, %v1476
      %v1486 = vsel %vm773, %v1482, %v1478
      %v1487 = vmul.f32 %v1485, %v778
      %v1488 = vmul.f32 %v1483, %v779
      %v1489 = vmul.f32 %v1486, %v778
      %v1490 = vmul.f32 %v1484, %v779
      %1491 = vrot.lane.b32.xlu0 %v1421, 127
      %v1492 = vpop.permute.xlu0 %1491
      %1493 = vrot.lane.b32.xlu0 %v1423, 127
      %v1494 = vpop.permute.xlu0 %1493
      %1495 = vrot.lane.b32.xlu0 %v1422, 127
      %v1496 = vpop.permute.xlu0 %1495
      %1497 = vrot.lane.b32.xlu0 %v1424, 127
      %v1498 = vpop.permute.xlu0 %1497
      %v1499 = vsel %vm792, %v1492, %v1496
      %v1500 = vsel %vm792, %v1494, %v1498
      %v1501 = vsel %vm792, %v1496, %v1492
      %v1502 = vsel %vm792, %v1498, %v1494
      %v1503 = vmul.f32 %v1499, %v797
      %v1504 = vmul.f32 %v1501, %v798
      %v1505 = vmul.f32 %v1500, %v797
      %v1506 = vmul.f32 %v1502, %v798
      %1507 = vrot.lane.b32.xlu0 %v1421, 113
      %v1508 = vpop.permute.xlu0 %1507
      %1509 = vrot.lane.b32.xlu0 %v1423, 113
      %v1510 = vpop.permute.xlu0 %1509
      %1511 = vrot.lane.b32.xlu0 %v1422, 113
      %v1512 = vpop.permute.xlu0 %1511
      %1513 = vrot.lane.b32.xlu0 %v1424, 113
      %v1514 = vpop.permute.xlu0 %1513
      %v1515 = vsel %vm811, %v1508, %v1512
      %v1516 = vsel %vm811, %v1510, %v1514
      %v1517 = vsel %vm811, %v1512, %v1508
      %v1518 = vsel %vm811, %v1514, %v1510
      %v1519 = vmul.f32 %v1515, %v816
      %v1520 = vmul.f32 %v1517, %v817
      %v1521 = vmul.f32 %v1516, %v816
      %v1522 = vmul.f32 %v1518, %v817
      %1523 = vrot.lane.b32.xlu0 %v1421, 112
      %v1524 = vpop.permute.xlu0 %1523
      %1525 = vrot.lane.b32.xlu0 %v1423, 112
      %v1526 = vpop.permute.xlu0 %1525
      %1527 = vrot.lane.b32.xlu0 %v1422, 112
      %v1528 = vpop.permute.xlu0 %1527
      %1529 = vrot.lane.b32.xlu0 %v1424, 112
      %v1530 = vpop.permute.xlu0 %1529
      %v1531 = vsel %vm830, %v1524, %v1528
      %v1532 = vsel %vm830, %v1526, %v1530
      %v1533 = vsel %vm830, %v1528, %v1524
      %v1534 = vsel %vm830, %v1530, %v1526
      %v1535 = vmul.f32 %v1531, %v835
      %v1536 = vmul.f32 %v1533, %v836
      %v1537 = vmul.f32 %v1532, %v835
      %v1538 = vmul.f32 %v1534, %v836
      %1539 = vrot.lane.b32.xlu0 %v1421, 111
      %v1540 = vpop.permute.xlu0 %1539
      %1541 = vrot.lane.b32.xlu0 %v1423, 111
      %v1542 = vpop.permute.xlu0 %1541
      %1543 = vrot.lane.b32.xlu0 %v1422, 111
      %v1544 = vpop.permute.xlu0 %1543
      %1545 = vrot.lane.b32.xlu0 %v1424, 111
      %v1546 = vpop.permute.xlu0 %1545
      %v1547 = vsel %vm849, %v1540, %v1544
      %v1548 = vsel %vm849, %v1542, %v1546
      %v1549 = vsel %vm849, %v1544, %v1540
      %v1550 = vsel %vm849, %v1546, %v1542
      %v1551 = vmul.f32 %v1547, %v854
      %v1552 = vmul.f32 %v1549, %v855
      %v1553 = vmul.f32 %v1548, %v854
      %v1554 = vmul.f32 %v1550, %v855
      %v1555 = vpack.c.bf16 %v1441, %v1439
      %v1556 = vpack.c.bf16 %v1442, %v1440
      %v1557 = vpack.c.bf16 %v1457, %v1455
      %v1558 = vpack.c.bf16 %v1458, %v1456
      %v1559 = vpack.c.bf16 %v1473, %v1471
      %v1560 = vpack.c.bf16 %v1474, %v1472
      %v1561 = vpack.c.bf16 %v1489, %v1487
      %v1562 = vpack.c.bf16 %v1490, %v1488
      %v1563 = vpack.c.bf16 %v1423, %v1421
      %v1564 = vpack.c.bf16 %v1424, %v1422
      %v1565 = vpack.c.bf16 %v1505, %v1503
      %v1566 = vpack.c.bf16 %v1506, %v1504
      %v1567 = vpack.c.bf16 %v1521, %v1519
      %v1568 = vpack.c.bf16 %v1522, %v1520
      %v1569 = vpack.c.bf16 %v1537, %v1535
      %v1570 = vpack.c.bf16 %v1538, %v1536
      %v1571 = vpack.c.bf16 %v1553, %v1551
      %v1572 = vpack.c.bf16 %v1554, %v1552
      %v1573 = vld [vmem:[%s11] sm:$0xff]
      %v1575 = vunpack.c.l.b16 %v1573
      %v1576 = vunpack.c.h.b16 %v1573
      %v1577 = vpack.c.b16 %v1575, %v1575
      %v1578 = vpack.c.b16 %v1576, %v1576
      %v1581 = vsel %vm889, %v1578, 0
      %1583 = vmatpush.bf16.msra.mxu0 %v1569
      %1584 = vmatpush.bf16.msra.mxu0 %v1567
      %1585 = vmatpush.bf16.msra.mxu0 %v1565
      %1586 = vmatpush.bf16.msra.mxu0 %v1563
      %1587 = vmatpush.bf16.msra.mxu0 %v1561
      %1588 = vmatpush.bf16.msra.mxu0 %v1559
      %1589 = vmatpush.bf16.msra.mxu0 %v1557
      %1590 = vmatpush.bf16.msra.mxu0 %v1555
      %1591 = vmatmul.bf16.gmra.mxu0 %v1577
      %v1592 = vpop.f32.mrf.mxu0
      %v1593 = vadd.f32 0.0, %v1592
      %v1594 = vpop.f32.mrf.mxu0
      %1595 = vdwg.mxu0
      %1596 = vmatpush.bf16.msra.mxu0 0
      %1597 = vmatpush.bf16.msra.mxu0 0
      %1598 = vmatpush.bf16.msra.mxu0 0
      %1599 = vmatpush.bf16.msra.mxu0 0
      %1600 = vmatpush.bf16.msra.mxu0 0
      %1601 = vmatpush.bf16.msra.mxu0 0
      %1602 = vmatpush.bf16.msra.mxu0 0
      %1603 = vmatpush.bf16.msra.mxu0 %v1571
      %1604 = vmatmul.bf16.gmra.mxu0 %v1581
      %v1605 = vpop.f32.mrf.mxu0
      %v1606 = vadd.f32 %v1593, %v1605
      %v1607 = vpop.f32.mrf.mxu0
      %1608 = vdwg.mxu0
      %1609 = vmatpush.bf16.msra.mxu0 %v1570
      %1610 = vmatpush.bf16.msra.mxu0 %v1568
      %1611 = vmatpush.bf16.msra.mxu0 %v1566
      %1612 = vmatpush.bf16.msra.mxu0 %v1564
      %1613 = vmatpush.bf16.msra.mxu0 %v1562
      %1614 = vmatpush.bf16.msra.mxu0 %v1560
      %1615 = vmatpush.bf16.msra.mxu0 %v1558
      %1616 = vmatpush.bf16.msra.mxu0 %v1556
      %1617 = vmatmul.bf16.gmra.mxu0 %v1577
      %v1618 = vpop.f32.mrf.mxu0
      %v1619 = vadd.f32 0.0, %v1618
      %v1620 = vpop.f32.mrf.mxu0
      %1621 = vdwg.mxu0
      %1622 = vmatpush.bf16.msra.mxu0 0
      %1623 = vmatpush.bf16.msra.mxu0 0
      %1624 = vmatpush.bf16.msra.mxu0 0
      %1625 = vmatpush.bf16.msra.mxu0 0
      %1626 = vmatpush.bf16.msra.mxu0 0
      %1627 = vmatpush.bf16.msra.mxu0 0
      %1628 = vmatpush.bf16.msra.mxu0 0
      %1629 = vmatpush.bf16.msra.mxu0 %v1572
      %1630 = vmatmul.bf16.gmra.mxu0 %v1581
      %v1631 = vpop.f32.mrf.mxu0
      %v1632 = vadd.f32 %v1619, %v1631
      %v1633 = vpop.f32.mrf.mxu0
      %1634 = vdwg.mxu0
      %v1635 = vadd.f32 %v1606, %v1632
      %1636 = vadd.xlane.f32.xlu0 %v1635
      %v1637 = vpop.xlane.xlu0 %1636
      %v1638 = vmul.f32 %v1637, %v961
      %v1639 = vrot.slane %v1638, 4
      %v1640 = vadd.f32 %v1638, %v1639
      %v1641 = vrot.slane %v1640, 2
      %v1642 = vadd.f32 %v1640, %v1641
      %v1643 = vrot.slane %v1642, 1
      %v1644 = vadd.f32 %v1642, %v1643
      %v1645 = vrcp.pop 8.0
      %v1646 = vmul.f32 8.0, %v1645
      %v1647 = vsub.f32 1.0, %v1646
      %v1648 = vmul.f32 %v1645, %v1647
      %v1649 = vadd.f32 %v1645, %v1648
      %vm1650 = vweird.f32 %v1645
      %v1651 = vsel %vm1650, %v1645, %v1649
      %v1652 = vmul.f32 %v1644, %v1651
      %v1653 = vsub.f32 %v1606, %v1652
      %v1654 = vsub.f32 %v1632, %v1652
      %v1655 = vmul.f32 %v1653, %v1653
      %v1656 = vmul.f32 %v1654, %v1654
      %v1657 = vadd.f32 %v1655, %v1656
      %1658 = vadd.xlane.f32.xlu0 %v1657
      %v1659 = vpop.xlane.xlu0 %1658
      %v1660 = vmul.f32 %v1659, %v961
      %v1661 = vrot.slane %v1660, 4
      %v1662 = vadd.f32 %v1660, %v1661
      %v1663 = vrot.slane %v1662, 2
      %v1664 = vadd.f32 %v1662, %v1663
      %v1665 = vrot.slane %v1664, 1
      %v1666 = vadd.f32 %v1664, %v1665
      %v1667 = vmul.f32 %v1666, %v1651
      %v1668 = vadd.f32 %v1667, 1e-05
      %v1669 = vrsqrt.pop %v1668
      %v1670 = vmul.f32 %v1669, %v1668
      %v1671 = vmul.f32 %v1670, %v1669
      %v1672 = vmul.f32 0.5, %v1671
      %v1673 = vsub.f32 1.5, %v1672
      %v1674 = vmul.f32 %v1669, %v1673
      %vm1675 = vweird.f32 %v1668
      %vm1676 = vweird.f32 %v1669
      %vm1677 = vmor %vm1675, %vm1676
      %v1678 = vsel %vm1677, %v1669, %v1674
      %v1679 = vmul.f32 %v1653, %v1678
      %v1680 = vmul.f32 %v1654, %v1678
      %1682 = vset.pattern.permute.xlu0 0
      %1683 = vperm.xlu0 %1682, %v1425
      %v1684 = vpop.permute.xlu0 %1683
      %v1686 = vmul.f32 %v1679, %v1684
      %v1687 = vmul.f32 %v1680, %v1684
      %1689 = vset.pattern.permute.xlu0 0
      %1690 = vperm.xlu0 %1689, %v1426
      %v1691 = vpop.permute.xlu0 %1690
      %v1693 = vadd.f32 %v1686, %v1691
      %v1694 = vadd.f32 %v1687, %v1691
      %v1695 = vmul.f32 %v1693, %v1693
      %v1696 = vmul.f32 %v1694, %v1694
      %v1697 = vmul.f32 %v1693, %v1695
      %v1698 = vmul.f32 %v1694, %v1696
      %v1699 = vmul.f32 %v1697, 0.044715
      %v1700 = vmul.f32 %v1698, 0.044715
      %v1701 = vadd.f32 %v1693, %v1699
      %v1702 = vadd.f32 %v1694, %v1700
      %v1703 = vmul.f32 %v1701, 0.7978846
      %v1704 = vmul.f32 %v1702, 0.7978846
      %v1705 = vtanh.pop %v1703
      %v1706 = vtanh.pop %v1704
      %v1707 = vadd.f32 %v1705, 1.0
      %v1708 = vadd.f32 %v1706, 1.0
      %v1709 = vmul.f32 %v1707, 0.5
      %v1710 = vmul.f32 %v1708, 0.5
      %v1711 = vmul.f32 %v1693, %v1709
      %v1712 = vmul.f32 %v1694, %v1710
      %v1713 = vld [vmem:[%s15] sm:$0xff]
      %v1714 = vld [vmem:[%s16] sm:$0xff]
      %1715 = vrot.lane.b32.xlu0 %v1711, 17
      %v1716 = vpop.permute.xlu0 %1715
      %1717 = vrot.lane.b32.xlu0 %v1712, 17
      %v1718 = vpop.permute.xlu0 %1717
      %v1719 = vsel %vm716, %v1716, %v1718
      %v1720 = vsel %vm716, %v1718, %v1716
      %v1721 = vmul.f32 %v1720, %v721
      %v1722 = vmul.f32 %v1719, %v722
      %1723 = vrot.lane.b32.xlu0 %v1711, 16
      %v1724 = vpop.permute.xlu0 %1723
      %1725 = vrot.lane.b32.xlu0 %v1712, 16
      %v1726 = vpop.permute.xlu0 %1725
      %v1727 = vsel %vm735, %v1724, %v1726
      %v1728 = vsel %vm735, %v1726, %v1724
      %v1729 = vmul.f32 %v1728, %v740
      %v1730 = vmul.f32 %v1727, %v741
      %1731 = vrot.lane.b32.xlu0 %v1711, 15
      %v1732 = vpop.permute.xlu0 %1731
      %1733 = vrot.lane.b32.xlu0 %v1712, 15
      %v1734 = vpop.permute.xlu0 %1733
      %v1735 = vsel %vm754, %v1732, %v1734
      %v1736 = vsel %vm754, %v1734, %v1732
      %v1737 = vmul.f32 %v1736, %v759
      %v1738 = vmul.f32 %v1735, %v760
      %1739 = vrot.lane.b32.xlu0 %v1711, 1
      %v1740 = vpop.permute.xlu0 %1739
      %1741 = vrot.lane.b32.xlu0 %v1712, 1
      %v1742 = vpop.permute.xlu0 %1741
      %v1743 = vsel %vm773, %v1740, %v1742
      %v1744 = vsel %vm773, %v1742, %v1740
      %v1745 = vmul.f32 %v1744, %v778
      %v1746 = vmul.f32 %v1743, %v779
      %1747 = vrot.lane.b32.xlu0 %v1711, 127
      %v1748 = vpop.permute.xlu0 %1747
      %1749 = vrot.lane.b32.xlu0 %v1712, 127
      %v1750 = vpop.permute.xlu0 %1749
      %v1751 = vsel %vm792, %v1748, %v1750
      %v1752 = vsel %vm792, %v1750, %v1748
      %v1753 = vmul.f32 %v1751, %v797
      %v1754 = vmul.f32 %v1752, %v798
      %1755 = vrot.lane.b32.xlu0 %v1711, 113
      %v1756 = vpop.permute.xlu0 %1755
      %1757 = vrot.lane.b32.xlu0 %v1712, 113
      %v1758 = vpop.permute.xlu0 %1757
      %v1759 = vsel %vm811, %v1756, %v1758
      %v1760 = vsel %vm811, %v1758, %v1756
      %v1761 = vmul.f32 %v1759, %v816
      %v1762 = vmul.f32 %v1760, %v817
      %1763 = vrot.lane.b32.xlu0 %v1711, 112
      %v1764 = vpop.permute.xlu0 %1763
      %1765 = vrot.lane.b32.xlu0 %v1712, 112
      %v1766 = vpop.permute.xlu0 %1765
      %v1767 = vsel %vm830, %v1764, %v1766
      %v1768 = vsel %vm830, %v1766, %v1764
      %v1769 = vmul.f32 %v1767, %v835
      %v1770 = vmul.f32 %v1768, %v836
      %1771 = vrot.lane.b32.xlu0 %v1711, 111
      %v1772 = vpop.permute.xlu0 %1771
      %1773 = vrot.lane.b32.xlu0 %v1712, 111
      %v1774 = vpop.permute.xlu0 %1773
      %v1775 = vsel %vm849, %v1772, %v1774
      %v1776 = vsel %vm849, %v1774, %v1772
      %v1777 = vmul.f32 %v1775, %v854
      %v1778 = vmul.f32 %v1776, %v855
      %v1779 = vpack.c.bf16 %v1729, %v1721
      %v1780 = vpack.c.bf16 %v1730, %v1722
      %v1781 = vpack.c.bf16 %v1745, %v1737
      %v1782 = vpack.c.bf16 %v1746, %v1738
      %v1783 = vpack.c.bf16 %v1753, %v1711
      %v1784 = vpack.c.bf16 %v1754, %v1712
      %v1785 = vpack.c.bf16 %v1769, %v1761
      %v1786 = vpack.c.bf16 %v1770, %v1762
      %v1787 = vpack.c.bf16 %v1777, %v1777
      %v1788 = vpack.c.bf16 %v1778, %v1778
      %v1789 = vld [vmem:[%s14] sm:$0xf]
      %vm1790 = vcmask 588800
      %v1792 = vsel %vm1790, %v1789, 0
      %vm1794 = vcmask 1043456
      %v1796 = vsel %vm1794, %v1787, 0
      %v1799 = vsel %vm1794, %v1788, 0
      %1801 = vmatpush.bf16.msra.mxu0 0
      %1802 = vmatpush.bf16.msra.mxu0 0
      %1803 = vmatpush.bf16.msra.mxu0 0
      %1804 = vmatpush.bf16.msra.mxu0 %v1796
      %1805 = vmatpush.bf16.msra.mxu0 %v1785
      %1806 = vmatpush.bf16.msra.mxu0 %v1783
      %1807 = vmatpush.bf16.msra.mxu0 %v1781
      %1808 = vmatpush.bf16.msra.mxu0 %v1779
      %1809 = vmatmul.bf16.gmra.mxu0 %v1792
      %v1810 = vpop.f32.mrf.mxu0
      %v1811 = vadd.f32 0.0, %v1810
      %v1812 = vpop.f32.mrf.mxu0
      %1813 = vdwg.mxu0
      %1814 = vmatpush.bf16.msra.mxu0 0
      %1815 = vmatpush.bf16.msra.mxu0 0
      %1816 = vmatpush.bf16.msra.mxu0 0
      %1817 = vmatpush.bf16.msra.mxu0 %v1799
      %1818 = vmatpush.bf16.msra.mxu0 %v1786
      %1819 = vmatpush.bf16.msra.mxu0 %v1784
      %1820 = vmatpush.bf16.msra.mxu0 %v1782
      %1821 = vmatpush.bf16.msra.mxu0 %v1780
      %1822 = vmatmul.bf16.gmra.mxu0 %v1792
      %v1823 = vpop.f32.mrf.mxu0
      %v1824 = vadd.f32 0.0, %v1823
      %v1825 = vpop.f32.mrf.mxu0
      %1826 = vdwg.mxu0
      %v1827 = vadd.f32 %v1811, %v1824
      %1828 = vadd.xlane.f32.xlu0 %v1827
      %v1829 = vpop.xlane.xlu0 %1828
      %v1830 = vmul.f32 %v1829, %v961
      %v1831 = vrot.slane %v1830, 4
      %v1832 = vadd.f32 %v1830, %v1831
      %v1833 = vrot.slane %v1832, 2
      %v1834 = vadd.f32 %v1832, %v1833
      %v1835 = vrot.slane %v1834, 1
      %v1836 = vadd.f32 %v1834, %v1835
      %v1837 = vmul.f32 %v1836, %v1651
      %v1838 = vsub.f32 %v1811, %v1837
      %v1839 = vsub.f32 %v1824, %v1837
      %v1840 = vmul.f32 %v1838, %v1838
      %v1841 = vmul.f32 %v1839, %v1839
      %v1842 = vadd.f32 %v1840, %v1841
      %1843 = vadd.xlane.f32.xlu0 %v1842
      %v1844 = vpop.xlane.xlu0 %1843
      %v1845 = vmul.f32 %v1844, %v961
      %v1846 = vrot.slane %v1845, 4
      %v1847 = vadd.f32 %v1845, %v1846
      %v1848 = vrot.slane %v1847, 2
      %v1849 = vadd.f32 %v1847, %v1848
      %v1850 = vrot.slane %v1849, 1
      %v1851 = vadd.f32 %v1849, %v1850
      %v1852 = vmul.f32 %v1851, %v1651
      %v1853 = vadd.f32 %v1852, 1e-05
      %v1854 = vrsqrt.pop %v1853
      %v1855 = vmul.f32 %v1854, %v1853
      %v1856 = vmul.f32 %v1855, %v1854
      %v1857 = vmul.f32 0.5, %v1856
      %v1858 = vsub.f32 1.5, %v1857
      %v1859 = vmul.f32 %v1854, %v1858
      %vm1860 = vweird.f32 %v1853
      %vm1861 = vweird.f32 %v1854
      %vm1862 = vmor %vm1860, %vm1861
      %v1863 = vsel %vm1862, %v1854, %v1859
      %v1864 = vmul.f32 %v1838, %v1863
      %v1865 = vmul.f32 %v1839, %v1863
      %1867 = vset.pattern.permute.xlu0 0
      %1868 = vperm.xlu0 %1867, %v1713
      %v1869 = vpop.permute.xlu0 %1868
      %v1871 = vmul.f32 %v1864, %v1869
      %v1872 = vmul.f32 %v1865, %v1869
      %1874 = vset.pattern.permute.xlu0 0
      %1875 = vperm.xlu0 %1874, %v1714
      %v1876 = vpop.permute.xlu0 %1875
      %v1878 = vadd.f32 %v1871, %v1876
      %v1879 = vadd.f32 %v1872, %v1876
      %v1880 = vld [vmem:[%s628] sm:$0x1]
      %v1881 = vxor.u32 %v1880, 2147483648
      %v1882 = vmul.f32 %v1881, 1.442695
      %v1883 = vpow.pop %v1882
      %v1884 = vadd.f32 %v1883, 1.0
      %v1885 = vrcp.pop %v1884
      %v1886 = vmul.f32 %v1884, %v1885
      %v1887 = vsub.f32 1.0, %v1886
      %v1888 = vmul.f32 %v1885, %v1887
      %v1889 = vadd.f32 %v1885, %v1888
      %vm1890 = vweird.f32 %v1884
      %vm1891 = vweird.f32 %v1885
      %vm1892 = vmor %vm1890, %vm1891
      %v1893 = vsel %vm1892, %v1885, %v1889
      %v1894 = vand.u32 2147483647, %v1884
      %vm1895 = vcmp.eq.f32.partialorder %v1894, 8.507059e+37
      %v1896 = vand.u32 %v1884, 2147483648
      %v1897 = vor.u32 1.1754944e-38, %v1896
      %v1898 = vsel %vm1895, %v1897, %v1893
      %v1899 = vmul.f32 1.0, %v1898
      %v1900 = vmul.f32 %v1880, %v1899
      %v1901 = vld [vmem:[%s17] sm:$0xff]
      %v1903 = vperm.slane %v1900, 0
      %v1905 = vmul.f32 %v1901, %v1903
      %1906 = vadd.xlane.f32.xlu0 %v1905
      %v1907 = vpop.xlane.xlu0 %1906
      %v1908 = vadd.f32 %v1878, %v1907
      %v1909 = vadd.f32 %v1879, %v1907
      %v1910 = vld [vmem:[%s18] sm:$0xff]
      %1912 = vset.pattern.permute.xlu0 0
      %1913 = vperm.xlu0 %1912, %v1910
      %v1914 = vpop.permute.xlu0 %1913
      %v1916 = vadd.f32 %v1908, %v1914
      %v1917 = vadd.f32 %v1909, %v1914
      %1918 = vst [vmem:[%s633] sm:$0xff] %v1916
      %1919 = vst [vmem:[%s633 + $0x8] sm:$0xff] %v1917
      %p1920 = scmp.lt.s32.totalorder %s30, 1
      %s1921 = scalar_select %p1920, %s30, 1
      %s1922 = smul.addr %s1921, 2
      %s1923 = smul.addr %s1922, 8
      %s1924 = scalar_lea.vmem %s19, %s1923
      // Predicated region
      $region97: #{up_forward.1} parent=95 // pred_check
        %p1925 = pneg %p462
      $region98: #{up_forward.1} parent=95 // pred_check_branch
        %1927 = sbr.rel (%p1925) target = $region100
      $region99: #{up_forward.1} parent=95 // pred_region
        _
      $region100: #{up_forward.1} parent=95 // pred_fallthru
        _
    $region96: #{up_forward.1} parent=5 // pred_fallthru
      _
    %p1928 = scmp.le.s32.totalorder 2, %s25
    // Predicated region
    $region101: #{up_forward.1} parent=5 // pred_check
      %p1929 = pneg %p1928
    $region102: #{up_forward.1} parent=5 // pred_check_branch
      %1931 = sbr.rel (%p1929) target = $region104
    $region103: #{up_forward.1} parent=5 // pred_region
      %s1932 = ssub.s32 %s25, 2
      // Predicated region
      $region105: #{up_forward.1} parent=103 // pred_check
        %p1933 = pneg %p468
      $region106: #{up_forward.1} parent=103 // pred_check_branch
        %1935 = sbr.rel (%p1933) target = $region108
      $region107: #{up_forward.1} parent=103 // pred_region
        %p1936 = scmp.lt.s32.totalorder %s31, 1
        %s1937 = scalar_select %p1936, %s31, 1
        %s1938 = smul.addr %s1937, 2
        %s1939 = smul.addr %s1938, 8
        %s1940 = scalar_lea.vmem %s19, %s1939
      $region108: #{up_forward.1} parent=103 // pred_fallthru
        _
    $region104: #{up_forward.1} parent=5 // pred_fallthru
      _
  $region6: #{up_forward.1} parent=0 // loop_footer
    %s29 = sadd.s32 1, %s25
  $region7: #{up_forward.1} parent=0 // loop_footer_branch
    %24 = sbr.rel target = $region3
  $region8: #{up_forward.1} parent=0 // loop_exit
    _

</llo_original>
